<compile_context>
chip_gen: v7x
topology: tpu7x:2x2x1
jax: 0.10.0
libtpu: 0.0.40
codegen_flags: <defaults>
</compile_context>

<pallas_src>
import functools

import numpy as np
import jax
import jax.numpy as jnp
from jax.experimental import pallas as pl
from jax.experimental.pallas import tpu as pltpu

# ----------------------------- config (Seq2SeqAttrs) -------------------------
NUM_NODES = 16
RNN_UNITS = 32
OUTPUT_DIM = 8            # config['output_dim'] (also input dim of decoder cell 0)
NUM_RNN_LAYERS = 2
MAX_DIFFUSION_STEP = 2
BATCH = 2
NUM_SUPPORTS = 1          # filter_type='laplacian' -> one scaled-Laplacian support
NUM_MATRICES = NUM_SUPPORTS * MAX_DIFFUSION_STEP + 1

# MXU operand dtype (bf16 = native MXU rate, half the VMEM/DMA bytes on
# v6e/v7x, fine on v5e's MXU).  All accumulation / gating / carried state f32.
COMPUTE_DTYPE = jnp.bfloat16

_WEIGHTS_PER_LAYER = 5   # wx_all, wgh, wch, bg, bc


# ----------------------------- graph support (setup glue) --------------------
def scaled_laplacian(adj: np.ndarray) -> np.ndarray:
    """L_scaled = 2 L / lambda_max - I, L = I - D^-1/2 A D^-1/2 (symmetrized)."""
    adj = np.maximum(adj, adj.T)
    d = adj.sum(axis=1)
    d_inv_sqrt = np.zeros_like(d)
    nz = d > 0
    d_inv_sqrt[nz] = d[nz] ** -0.5
    n = adj.shape[0]
    L = np.eye(n) - d_inv_sqrt[:, None] * adj * d_inv_sqrt[None, :]
    lam = float(np.linalg.eigvalsh(L).max())
    return ((2.0 / lam) * L - np.eye(n)).astype(np.float32)


# ----------------------------- fused Pallas kernel ---------------------------
def _make_decoder_kernel(num_layers, k_steps, units, cdt):
    n_layer_refs = _WEIGHTS_PER_LAYER * num_layers

    def kernel(x0_ref, h0_ref, sup_ref, *rest):
        # Ref layout:
        #   x0_ref     (B*N, Din0)          external decoder input (used at t==0)
        #   h0_ref     (L, B*N, U)          initial hidden state   (used at t==0)
        #   sup_ref    (B*N, B*N)           block-diagonal kron(I_B, S), bf16
        #   per layer: wx_all (M*Din, 3U), wgh (M*U, 2U), wch (M*U, U)   [bf16]
        #              bg (1, 2U), bc (1, U)                             [f32]
        #   pw (U, OUT) bf16, pb (1, OUT) f32
        #   out_ref    (1, B*N, OUT)        this step's projection block
        #   hstate_ref (L, B*N, U)          VMEM-resident hidden-state carry
        #   xcarry_ref (B*N, OUT)           fed-back decoder input (scratch)
        layer_refs = rest[:n_layer_refs]
        pw_ref = rest[n_layer_refs]
        pb_ref = rest[n_layer_refs + 1]
        out_ref = rest[n_layer_refs + 2]
        hstate_ref = rest[n_layer_refs + 3]
        xcarry_ref = rest[n_layer_refs + 4]

        t = pl.program_id(0)

        @pl.when(t == 0)
        def _init():                      # load externally supplied state once
            hstate_ref[...] = h0_ref[...]
            xcarry_ref[...] = x0_ref[...]

        sup = sup_ref[...]                # loaded once per step, reused everywhere

        def chain_cat(v):
            """Chebyshev diffusion chain T0..TK on the batched node axis,
            lane-concatenated -> (B*N, (K+1)*C), cast to the MXU dtype."""
            mats = [v]
            if k_steps >= 1:
                v1 = jnp.dot(sup, v.astype(cdt),
                             preferred_element_type=jnp.float32)
                mats.append(v1)
                vm2, vm1 = v, v1
                for _ in range(2, k_steps + 1):
                    v2 = (2.0 * jnp.dot(sup, vm1.astype(cdt),
                                        preferred_element_type=jnp.float32) - vm2)
                    mats.append(v2)
                    vm2, vm1 = vm1, v2
            return jnp.concatenate(mats, axis=-1).astype(cdt)

        # ---- hoisted h-path (independent of the serial layer chain) ---------
        # Every layer's old hidden state is available at step entry, so its
        # diffusion chain and gate matmul are off the layer-to-layer critical
        # path; compute them all up front.
        h_old = [hstate_ref[l] for l in range(num_layers)]          # f32
        h_gate = []
        for l in range(num_layers):
            _, wgh_ref, _, bg_ref, _ = layer_refs[
                _WEIGHTS_PER_LAYER * l:_WEIGHTS_PER_LAYER * (l + 1)]
            hc = chain_cat(h_old[l])                                # (B*N, M*U)
            h_gate.append(jnp.dot(hc, wgh_ref[...],
                                  preferred_element_type=jnp.float32)
                          + bg_ref[...])                            # (B*N, 2U)

        # ---- serial layer chain ---------------------------------------------
        out = xcarry_ref[...]                                       # (B*N, Din0)
        for l in range(num_layers):                                 # tiny static unroll
            wx_ref, _, wch_ref, _, bc_ref = layer_refs[
                _WEIGHTS_PER_LAYER * l:_WEIGHTS_PER_LAYER * (l + 1)]
            h = h_old[l]

            xc = chain_cat(out)                                     # (B*N, M*Din)
            # one fat matmul: x-path contribution to BOTH gates and candidate
            x_contrib = jnp.dot(xc, wx_ref[...],
                                preferred_element_type=jnp.float32)  # (B*N, 3U)

            gates = jax.nn.sigmoid(x_contrib[:, :2 * units] + h_gate[l])
            r = gates[:, :units]
            u = gates[:, units:]

            rhc = chain_cat(r * h)                                  # (B*N, M*U)
            c = jnp.tanh(x_contrib[:, 2 * units:]
                         + jnp.dot(rhc, wch_ref[...],
                                   preferred_element_type=jnp.float32)
                         + bc_ref[...])                             # (B*N, U)

            h_new = u * h + (1.0 - u) * c                           # (B*N, U)
            hstate_ref[l] = h_new                                   # VMEM carry
            out = h_new

        proj = (jnp.dot(out.astype(cdt), pw_ref[...],
                        preferred_element_type=jnp.float32) + pb_ref[...])
        out_ref[0] = proj
        xcarry_ref[...] = proj            # fed back as next step's decoder input

    return kernel


# ----------------------------- wrappers ---------------------------------------
def prepare_decoder_params(params, support, batch):
    """One-time setup: flatten/concat per-layer weights into the kernel's fused
    layouts (bf16 matmul operands, f32 biases) and build the block-diagonal
    batched support kron(I_B, S)."""
    cdt = COMPUTE_DTYPE
    flat = []
    for cp in params['cells']:
        m, din, two_u = cp['wgx'].shape
        # x-path weights for gates and candidate concatenated along output dim
        wx_all = jnp.concatenate(
            [cp['wgx'].reshape(m * din, two_u),
             cp['wcx'].reshape(m * din, RNN_UNITS)], axis=1).astype(cdt)   # (M*Din, 3U)
        flat += [wx_all,
                 cp['wgh'].reshape(m * RNN_UNITS, two_u).astype(cdt),      # (M*U, 2U)
                 cp['wch'].reshape(m * RNN_UNITS, RNN_UNITS).astype(cdt),  # (M*U, U)
                 cp['bg'].astype(jnp.float32), cp['bc'].astype(jnp.float32)]
    flat += [params['proj_w'].astype(cdt), params['proj_b'].astype(jnp.float32)]
    sup_big = jnp.kron(jnp.eye(batch, dtype=jnp.float32), support).astype(cdt)
    return sup_big, tuple(flat)


@functools.partial(jax.jit, static_argnames=("horizon",))
def _decoder_run(inputs, hidden_state, sup_big, flat_weights, *, horizon):
    """`horizon` fused decode steps in ONE pallas_call (weights VMEM-resident,
    hidden state + fed-back input carried in VMEM across the step grid)."""
    batch = inputs.shape[0]
    rows = batch * NUM_NODES
    # row-major bitcasts into the (B*N, feature) compute layout (free)
    x = inputs.reshape(rows, OUTPUT_DIM).astype(jnp.float32)
    h = hidden_state.reshape(NUM_RNN_LAYERS, rows, RNN_UNITS).astype(jnp.float32)

    kernel = _make_decoder_kernel(NUM_RNN_LAYERS, MAX_DIFFUSION_STEP,
                                  RNN_UNITS, COMPUTE_DTYPE)

    def const_spec(shape):
        nd = len(shape)
        return pl.BlockSpec(shape, lambda t: (0,) * nd)   # resident across steps

    in_specs = ([const_spec(x.shape), const_spec(h.shape), const_spec(sup_big.shape)]
                + [const_spec(w.shape) for w in flat_weights])

    proj_seq, h_final = pl.pallas_call(
        kernel,
        grid=(horizon,),
        out_shape=(
            jax.ShapeDtypeStruct((horizon, rows, OUTPUT_DIM), jnp.float32),
            jax.ShapeDtypeStruct((NUM_RNN_LAYERS, rows, RNN_UNITS), jnp.float32)),
        in_specs=in_specs,
        out_specs=(
            pl.BlockSpec((1, rows, OUTPUT_DIM), lambda t: (t, 0, 0)),
            pl.BlockSpec((NUM_RNN_LAYERS, rows, RNN_UNITS), lambda t: (0, 0, 0)),
        ),
        scratch_shapes=[pltpu.VMEM((rows, OUTPUT_DIM), jnp.float32)],
        input_output_aliases={1: 1},   # hidden-state updated in place
        compiler_params=pltpu.CompilerParams(
            dimension_semantics=("arbitrary",)),
    )(x, h, sup_big, *flat_weights)

    # row-major bitcasts back to the module's external layout (free)
    outputs = proj_seq.reshape(horizon, batch, NUM_NODES * OUTPUT_DIM)
    new_hidden = h_final.reshape(NUM_RNN_LAYERS, batch, NUM_NODES * RNN_UNITS)
    return outputs, new_hidden


def decoder_forward(inputs, hidden_state, sup_big, flat_weights):
    """Single decode step == DecoderModel.forward.
       inputs: (B, num_nodes*output_dim)
       hidden_state: (num_layers, B, num_nodes*rnn_units)
       returns (output (B, num_nodes*output_dim),
                new_hidden (num_layers, B, num_nodes*rnn_units))."""
    out_seq, new_hidden = _decoder_run(inputs, hidden_state, sup_big,
                                       flat_weights, horizon=1)
    return out_seq[0], new_hidden


def decoder_rollout(inputs, hidden_state, sup_big, flat_weights, horizon):
    """Decoder driven over a horizon: each step's projection is fed back as the
    next step's input (eval-mode seq2seq decoding), all inside one kernel."""
    return _decoder_run(inputs, hidden_state, sup_big, flat_weights,
                        horizon=horizon)


# ----------------------------- deterministic parameters -----------------------
def init_params(key):
    params = {'cells': []}
    keys = jax.random.split(key, NUM_RNN_LAYERS * 4 + 1)
    in_dims = [OUTPUT_DIM] + [RNN_UNITS] * (NUM_RNN_LAYERS - 1)
    ki = 0
    for layer in range(NUM_RNN_LAYERS):
        din = in_dims[layer]
        wgx = 0.1 * jax.random.normal(keys[ki], (NUM_MATRICES, din, 2 * RNN_UNITS), jnp.float32); ki += 1
        wgh = 0.1 * jax.random.normal(keys[ki], (NUM_MATRICES, RNN_UNITS, 2 * RNN_UNITS), jnp.float32); ki += 1
        wcx = 0.1 * jax.random.normal(keys[ki], (NUM_MATRICES, din, RNN_UNITS), jnp.float32); ki += 1
        wch = 0.1 * jax.random.normal(keys[ki], (NUM_MATRICES, RNN_UNITS, RNN_UNITS), jnp.float32); ki += 1
        bg = jnp.ones((1, 2 * RNN_UNITS), jnp.float32)    # gate bias_start = 1.0 (DCGRU convention)
        bc = jnp.zeros((1, RNN_UNITS), jnp.float32)       # candidate bias_start = 0.0
        params['cells'].append(dict(wgx=wgx, wgh=wgh, bg=bg, wcx=wcx, wch=wch, bc=bc))
    params['proj_w'] = 0.1 * jax.random.normal(keys[ki], (RNN_UNITS, OUTPUT_DIM), jnp.float32)
    params['proj_b'] = jnp.zeros((1, OUTPUT_DIM), jnp.float32)
    return params


# ----------------------------- main -------------------------------------------
if __name__ == "__main__":
    key = jax.random.PRNGKey(0)
    k_adj, k_in, k_hid, k_par = jax.random.split(key, 4)

    # deterministic synthetic adjacency (with a ring to guarantee connectivity)
    adj = np.asarray(jax.random.uniform(k_adj, (NUM_NODES, NUM_NODES)) > 0.5,
                     dtype=np.float32)
    np.fill_diagonal(adj, 0.0)
    for i in range(NUM_NODES):
        adj[i, (i + 1) % NUM_NODES] = 1.0
    support = jnp.asarray(scaled_laplacian(adj))

    params = init_params(k_par)
    sup_big, flat_weights = prepare_decoder_params(params, support, BATCH)

    inputs = jax.random.normal(k_in, (BATCH, NUM_NODES * OUTPUT_DIM), jnp.float32)
    hidden = jax.random.normal(
        k_hid, (NUM_RNN_LAYERS, BATCH, NUM_NODES * RNN_UNITS), jnp.float32)

    # --- single decode step == DecoderModel.forward ---
    output, new_hidden = decoder_forward(inputs, hidden, sup_big, flat_weights)
    jax.block_until_ready((output, new_hidden))
    assert output.shape == (BATCH, NUM_NODES * OUTPUT_DIM)
    assert new_hidden.shape == (NUM_RNN_LAYERS, BATCH, NUM_NODES * RNN_UNITS)
    assert bool(jnp.all(jnp.isfinite(output)))
    assert bool(jnp.all(jnp.isfinite(new_hidden)))

    # --- multi-step decode in ONE launch (weights stay VMEM-resident) ---
    HORIZON = 8
    out_seq, final_hidden = decoder_rollout(inputs, hidden, sup_big,
                                            flat_weights, HORIZON)
    jax.block_until_ready((out_seq, final_hidden))
    assert out_seq.shape == (HORIZON, BATCH, NUM_NODES * OUTPUT_DIM)
    assert final_hidden.shape == (NUM_RNN_LAYERS, BATCH, NUM_NODES * RNN_UNITS)
    assert bool(jnp.all(jnp.isfinite(out_seq)))
    assert bool(jnp.all(jnp.isfinite(final_hidden)))
    # step 0 of the fused rollout must equal the single-step module forward
    assert bool(jnp.allclose(out_seq[0], output, atol=1e-4, rtol=1e-4))

    print("KERNEL_OK")
</pallas_src>

<mosaic_0001>
module attributes {stable_mosaic.version = 11 : i64} {
  func.func @kernel(%arg0: i32, %arg1: memref<32x8xf32, #tpu.memory_space<vmem>>, %arg2: memref<2x32x32xf32, #tpu.memory_space<vmem>>, %arg3: memref<32x32xbf16, #tpu.memory_space<vmem>>, %arg4: memref<24x96xbf16, #tpu.memory_space<vmem>>, %arg5: memref<96x64xbf16, #tpu.memory_space<vmem>>, %arg6: memref<96x32xbf16, #tpu.memory_space<vmem>>, %arg7: memref<1x64xf32, #tpu.memory_space<vmem>>, %arg8: memref<1x32xf32, #tpu.memory_space<vmem>>, %arg9: memref<96x96xbf16, #tpu.memory_space<vmem>>, %arg10: memref<96x64xbf16, #tpu.memory_space<vmem>>, %arg11: memref<96x32xbf16, #tpu.memory_space<vmem>>, %arg12: memref<1x64xf32, #tpu.memory_space<vmem>>, %arg13: memref<1x32xf32, #tpu.memory_space<vmem>>, %arg14: memref<32x8xbf16, #tpu.memory_space<vmem>>, %arg15: memref<1x8xf32, #tpu.memory_space<vmem>>, %arg16: memref<1x32x8xf32, #tpu.memory_space<vmem>>, %arg17: memref<2x32x32xf32, #tpu.memory_space<vmem>>, %arg18: memref<32x8xf32, #tpu.memory_space<vmem>>) attributes {dimension_semantics = [#tpu.dimension_semantics<arbitrary>], iteration_bounds = array<i64: 1>, scalar_prefetch = 0 : i64, scratch_operands = 1 : i64, tpu.core_type = #tpu.core_type<tc>, window_params = [{pipeline_mode = #tpu.pipeline_mode<synchronous>, transform_indices = @transform_0, window_bounds = array<i64: 32, 8>}, {pipeline_mode = #tpu.pipeline_mode<synchronous>, transform_indices = @transform_1, window_bounds = array<i64: 2, 32, 32>}, {pipeline_mode = #tpu.pipeline_mode<synchronous>, transform_indices = @transform_2, window_bounds = array<i64: 32, 32>}, {pipeline_mode = #tpu.pipeline_mode<synchronous>, transform_indices = @transform_3, window_bounds = array<i64: 24, 96>}, {pipeline_mode = #tpu.pipeline_mode<synchronous>, transform_indices = @transform_4, window_bounds = array<i64: 96, 64>}, {pipeline_mode = #tpu.pipeline_mode<synchronous>, transform_indices = @transform_5, window_bounds = array<i64: 96, 32>}, {pipeline_mode = #tpu.pipeline_mode<synchronous>, transform_indices = @transform_6, window_bounds = array<i64: 1, 64>}, {pipeline_mode = #tpu.pipeline_mode<synchronous>, transform_indices = @transform_7, window_bounds = array<i64: 1, 32>}, {pipeline_mode = #tpu.pipeline_mode<synchronous>, transform_indices = @transform_8, window_bounds = array<i64: 96, 96>}, {pipeline_mode = #tpu.pipeline_mode<synchronous>, transform_indices = @transform_9, window_bounds = array<i64: 96, 64>}, {pipeline_mode = #tpu.pipeline_mode<synchronous>, transform_indices = @transform_10, window_bounds = array<i64: 96, 32>}, {pipeline_mode = #tpu.pipeline_mode<synchronous>, transform_indices = @transform_11, window_bounds = array<i64: 1, 64>}, {pipeline_mode = #tpu.pipeline_mode<synchronous>, transform_indices = @transform_12, window_bounds = array<i64: 1, 32>}, {pipeline_mode = #tpu.pipeline_mode<synchronous>, transform_indices = @transform_13, window_bounds = array<i64: 32, 8>}, {pipeline_mode = #tpu.pipeline_mode<synchronous>, transform_indices = @transform_14, window_bounds = array<i64: 1, 8>}, {transform_indices = @transform_15, window_bounds = array<i64: 1, 32, 8>}, {pipeline_mode = #tpu.pipeline_mode<synchronous>, transform_indices = @transform_16, window_bounds = array<i64: 2, 32, 32>}]} {
    %c0_i32 = arith.constant 0 : i32
    %0 = arith.cmpi eq, %arg0, %c0_i32 : i32
    %1 = arith.extui %0 : i1 to i32
    %c0_i32_0 = arith.constant 0 : i32
    %2 = arith.cmpi ne, %1, %c0_i32_0 : i32
    scf.if %2 {
      %c0_72 = arith.constant 0 : index
      %c0_73 = arith.constant 0 : index
      %c0_74 = arith.constant 0 : index
      %139 = vector.load %arg2[%c0_72, %c0_73, %c0_74] : memref<2x32x32xf32, #tpu.memory_space<vmem>>, vector<2x32x32xf32>
      %c0_75 = arith.constant 0 : index
      %c0_76 = arith.constant 0 : index
      %c0_77 = arith.constant 0 : index
      %140 = vector.load %arg17[%c0_75, %c0_76, %c0_77] : memref<2x32x32xf32, #tpu.memory_space<vmem>>, vector<2x32x32xf32>
      tpu.vector_store %arg17[%c0_75, %c0_76, %c0_77], %139 {strides = array<i32>} : memref<2x32x32xf32, #tpu.memory_space<vmem>>, vector<2x32x32xf32>,
      %c0_78 = arith.constant 0 : index
      %c0_79 = arith.constant 0 : index
      %141 = vector.load %arg1[%c0_78, %c0_79] : memref<32x8xf32, #tpu.memory_space<vmem>>, vector<32x8xf32>
      %c0_80 = arith.constant 0 : index
      %c0_81 = arith.constant 0 : index
      %142 = vector.load %arg18[%c0_80, %c0_81] : memref<32x8xf32, #tpu.memory_space<vmem>>, vector<32x8xf32>
      tpu.vector_store %arg18[%c0_80, %c0_81], %141 {strides = array<i32>} : memref<32x8xf32, #tpu.memory_space<vmem>>, vector<32x8xf32>,
    } else {
    }
    %c0 = arith.constant 0 : index
    %c0_1 = arith.constant 0 : index
    %3 = vector.load %arg3[%c0, %c0_1] : memref<32x32xbf16, #tpu.memory_space<vmem>>, vector<32x32xbf16>
    %c0_2 = arith.constant 0 : index
    %c0_3 = arith.constant 0 : index
    %c0_4 = arith.constant 0 : index
    %4 = vector.load %arg17[%c0_2, %c0_3, %c0_4] : memref<2x32x32xf32, #tpu.memory_space<vmem>>, vector<1x32x32xf32>
    %5 = vector.shape_cast %4 : vector<1x32x32xf32> to vector<32x32xf32>
    %c1 = arith.constant 1 : index
    %c0_5 = arith.constant 0 : index
    %c0_6 = arith.constant 0 : index
    %6 = vector.load %arg17[%c1, %c0_5, %c0_6] : memref<2x32x32xf32, #tpu.memory_space<vmem>>, vector<1x32x32xf32>
    %7 = vector.shape_cast %6 : vector<1x32x32xf32> to vector<32x32xf32>
    %8 = arith.truncf %5 : vector<32x32xf32> to vector<32x32xbf16>
    %cst = arith.constant dense<0.000000e+00> : vector<32x32xf32>
    %9 = tpu.matmul %3, %8, %cst {dimension_numbers = #tpu.dot_dimension_numbers<[1], [0], [0], [1], [0, 0, 1, 1], [], []>} : vector<32x32xbf16>, vector<32x32xbf16>, vector<32x32xf32> -> vector<32x32xf32>
    %10 = arith.truncf %9 : vector<32x32xf32> to vector<32x32xbf16>
    %cst_7 = arith.constant dense<0.000000e+00> : vector<32x32xf32>
    %11 = tpu.matmul %3, %10, %cst_7 {dimension_numbers = #tpu.dot_dimension_numbers<[1], [0], [0], [1], [0, 0, 1, 1], [], []>} : vector<32x32xbf16>, vector<32x32xbf16>, vector<32x32xf32> -> vector<32x32xf32>
    %cst_8 = arith.constant 2.000000e+00 : f32
    %12 = vector.broadcast %cst_8 : f32 to vector<32x32xf32>
    %13 = arith.mulf %12, %11 : vector<32x32xf32>
    %14 = arith.subf %13, %5 : vector<32x32xf32>
    %15 = tpu.concatenate %5, %9, %14 in 1 : vector<32x32xf32>, vector<32x32xf32>, vector<32x32xf32> -> vector<32x96xf32>
    %16 = arith.truncf %15 : vector<32x96xf32> to vector<32x96xbf16>
    %c0_9 = arith.constant 0 : index
    %c0_10 = arith.constant 0 : index
    %17 = vector.load %arg5[%c0_9, %c0_10] : memref<96x64xbf16, #tpu.memory_space<vmem>>, vector<96x64xbf16>
    %cst_11 = arith.constant dense<0.000000e+00> : vector<32x64xf32>
    %18 = tpu.matmul %16, %17, %cst_11 {dimension_numbers = #tpu.dot_dimension_numbers<[1], [0], [0], [1], [0, 0, 1, 1], [], []>} : vector<32x96xbf16>, vector<96x64xbf16>, vector<32x64xf32> -> vector<32x64xf32>
    %c0_12 = arith.constant 0 : index
    %c0_13 = arith.constant 0 : index
    %19 = vector.load %arg7[%c0_12, %c0_13] : memref<1x64xf32, #tpu.memory_space<vmem>>, vector<1x64xf32>
    %20 = vector.broadcast %19 : vector<1x64xf32> to vector<32x64xf32>
    %21 = arith.addf %18, %20 : vector<32x64xf32>
    %22 = arith.truncf %7 : vector<32x32xf32> to vector<32x32xbf16>
    %cst_14 = arith.constant dense<0.000000e+00> : vector<32x32xf32>
    %23 = tpu.matmul %3, %22, %cst_14 {dimension_numbers = #tpu.dot_dimension_numbers<[1], [0], [0], [1], [0, 0, 1, 1], [], []>} : vector<32x32xbf16>, vector<32x32xbf16>, vector<32x32xf32> -> vector<32x32xf32>
    %24 = arith.truncf %23 : vector<32x32xf32> to vector<32x32xbf16>
    %cst_15 = arith.constant dense<0.000000e+00> : vector<32x32xf32>
    %25 = tpu.matmul %3, %24, %cst_15 {dimension_numbers = #tpu.dot_dimension_numbers<[1], [0], [0], [1], [0, 0, 1, 1], [], []>} : vector<32x32xbf16>, vector<32x32xbf16>, vector<32x32xf32> -> vector<32x32xf32>
    %cst_16 = arith.constant 2.000000e+00 : f32
    %26 = vector.broadcast %cst_16 : f32 to vector<32x32xf32>
    %27 = arith.mulf %26, %25 : vector<32x32xf32>
    %28 = arith.subf %27, %7 : vector<32x32xf32>
    %29 = tpu.concatenate %7, %23, %28 in 1 : vector<32x32xf32>, vector<32x32xf32>, vector<32x32xf32> -> vector<32x96xf32>
    %30 = arith.truncf %29 : vector<32x96xf32> to vector<32x96xbf16>
    %c0_17 = arith.constant 0 : index
    %c0_18 = arith.constant 0 : index
    %31 = vector.load %arg10[%c0_17, %c0_18] : memref<96x64xbf16, #tpu.memory_space<vmem>>, vector<96x64xbf16>
    %cst_19 = arith.constant dense<0.000000e+00> : vector<32x64xf32>
    %32 = tpu.matmul %30, %31, %cst_19 {dimension_numbers = #tpu.dot_dimension_numbers<[1], [0], [0], [1], [0, 0, 1, 1], [], []>} : vector<32x96xbf16>, vector<96x64xbf16>, vector<32x64xf32> -> vector<32x64xf32>
    %c0_20 = arith.constant 0 : index
    %c0_21 = arith.constant 0 : index
    %33 = vector.load %arg12[%c0_20, %c0_21] : memref<1x64xf32, #tpu.memory_space<vmem>>, vector<1x64xf32>
    %34 = vector.broadcast %33 : vector<1x64xf32> to vector<32x64xf32>
    %35 = arith.addf %32, %34 : vector<32x64xf32>
    %c0_22 = arith.constant 0 : index
    %c0_23 = arith.constant 0 : index
    %36 = vector.load %arg18[%c0_22, %c0_23] : memref<32x8xf32, #tpu.memory_space<vmem>>, vector<32x8xf32>
    %37 = arith.truncf %36 : vector<32x8xf32> to vector<32x8xbf16>
    %cst_24 = arith.constant dense<0.000000e+00> : vector<32x8xf32>
    %38 = tpu.matmul %3, %37, %cst_24 {dimension_numbers = #tpu.dot_dimension_numbers<[1], [0], [0], [1], [0, 0, 1, 1], [], []>} : vector<32x32xbf16>, vector<32x8xbf16>, vector<32x8xf32> -> vector<32x8xf32>
    %39 = arith.truncf %38 : vector<32x8xf32> to vector<32x8xbf16>
    %cst_25 = arith.constant dense<0.000000e+00> : vector<32x8xf32>
    %40 = tpu.matmul %3, %39, %cst_25 {dimension_numbers = #tpu.dot_dimension_numbers<[1], [0], [0], [1], [0, 0, 1, 1], [], []>} : vector<32x32xbf16>, vector<32x8xbf16>, vector<32x8xf32> -> vector<32x8xf32>
    %cst_26 = arith.constant 2.000000e+00 : f32
    %41 = vector.broadcast %cst_26 : f32 to vector<32x8xf32>
    %42 = arith.mulf %41, %40 : vector<32x8xf32>
    %43 = arith.subf %42, %36 : vector<32x8xf32>
    %44 = tpu.concatenate %36, %38, %43 in 1 : vector<32x8xf32>, vector<32x8xf32>, vector<32x8xf32> -> vector<32x24xf32>
    %45 = arith.truncf %44 : vector<32x24xf32> to vector<32x24xbf16>
    %c0_27 = arith.constant 0 : index
    %c0_28 = arith.constant 0 : index
    %46 = vector.load %arg4[%c0_27, %c0_28] : memref<24x96xbf16, #tpu.memory_space<vmem>>, vector<24x96xbf16>
    %cst_29 = arith.constant dense<0.000000e+00> : vector<32x96xf32>
    %47 = tpu.matmul %45, %46, %cst_29 {dimension_numbers = #tpu.dot_dimension_numbers<[1], [0], [0], [1], [0, 0, 1, 1], [], []>} : vector<32x24xbf16>, vector<24x96xbf16>, vector<32x96xf32> -> vector<32x96xf32>
    %48 = vector.extract_strided_slice %47 {offsets = [0, 0], sizes = [32, 64], strides = [1, 1]} : vector<32x96xf32> to vector<32x64xf32>
    %49 = arith.addf %48, %21 : vector<32x64xf32>
    %50 = arith.negf %49 : vector<32x64xf32>
    %51 = math.exp %50 : vector<32x64xf32>
    %cst_30 = arith.constant 1.000000e+00 : f32
    %52 = vector.broadcast %cst_30 : f32 to vector<32x64xf32>
    %53 = arith.addf %52, %51 : vector<32x64xf32>
    %54 = arith.divf %52, %53 : vector<32x64xf32>
    %55 = vector.extract_strided_slice %54 {offsets = [0, 0], sizes = [32, 32], strides = [1, 1]} : vector<32x64xf32> to vector<32x32xf32>
    %56 = vector.extract_strided_slice %54 {offsets = [0, 32], sizes = [32, 32], strides = [1, 1]} : vector<32x64xf32> to vector<32x32xf32>
    %57 = arith.mulf %55, %5 : vector<32x32xf32>
    %58 = arith.truncf %57 : vector<32x32xf32> to vector<32x32xbf16>
    %cst_31 = arith.constant dense<0.000000e+00> : vector<32x32xf32>
    %59 = tpu.matmul %3, %58, %cst_31 {dimension_numbers = #tpu.dot_dimension_numbers<[1], [0], [0], [1], [0, 0, 1, 1], [], []>} : vector<32x32xbf16>, vector<32x32xbf16>, vector<32x32xf32> -> vector<32x32xf32>
    %60 = arith.truncf %59 : vector<32x32xf32> to vector<32x32xbf16>
    %cst_32 = arith.constant dense<0.000000e+00> : vector<32x32xf32>
    %61 = tpu.matmul %3, %60, %cst_32 {dimension_numbers = #tpu.dot_dimension_numbers<[1], [0], [0], [1], [0, 0, 1, 1], [], []>} : vector<32x32xbf16>, vector<32x32xbf16>, vector<32x32xf32> -> vector<32x32xf32>
    %cst_33 = arith.constant 2.000000e+00 : f32
    %62 = vector.broadcast %cst_33 : f32 to vector<32x32xf32>
    %63 = arith.mulf %62, %61 : vector<32x32xf32>
    %64 = arith.subf %63, %57 : vector<32x32xf32>
    %65 = tpu.concatenate %57, %59, %64 in 1 : vector<32x32xf32>, vector<32x32xf32>, vector<32x32xf32> -> vector<32x96xf32>
    %66 = arith.truncf %65 : vector<32x96xf32> to vector<32x96xbf16>
    %67 = vector.extract_strided_slice %47 {offsets = [0, 64], sizes = [32, 32], strides = [1, 1]} : vector<32x96xf32> to vector<32x32xf32>
    %c0_34 = arith.constant 0 : index
    %c0_35 = arith.constant 0 : index
    %68 = vector.load %arg6[%c0_34, %c0_35] : memref<96x32xbf16, #tpu.memory_space<vmem>>, vector<96x32xbf16>
    %cst_36 = arith.constant dense<0.000000e+00> : vector<32x32xf32>
    %69 = tpu.matmul %66, %68, %cst_36 {dimension_numbers = #tpu.dot_dimension_numbers<[1], [0], [0], [1], [0, 0, 1, 1], [], []>} : vector<32x96xbf16>, vector<96x32xbf16>, vector<32x32xf32> -> vector<32x32xf32>
    %70 = arith.addf %67, %69 : vector<32x32xf32>
    %c0_37 = arith.constant 0 : index
    %c0_38 = arith.constant 0 : index
    %71 = vector.load %arg8[%c0_37, %c0_38] : memref<1x32xf32, #tpu.memory_space<vmem>>, vector<1x32xf32>
    %72 = vector.broadcast %71 : vector<1x32xf32> to vector<32x32xf32>
    %73 = arith.addf %70, %72 : vector<32x32xf32>
    %74 = math.tanh %73 : vector<32x32xf32>
    %75 = arith.mulf %56, %5 : vector<32x32xf32>
    %cst_39 = arith.constant 1.000000e+00 : f32
    %76 = vector.broadcast %cst_39 : f32 to vector<32x32xf32>
    %77 = arith.subf %76, %56 : vector<32x32xf32>
    %78 = arith.mulf %77, %74 : vector<32x32xf32>
    %79 = arith.addf %75, %78 : vector<32x32xf32>
    %c0_40 = arith.constant 0 : index
    %c0_41 = arith.constant 0 : index
    %c0_42 = arith.constant 0 : index
    %80 = vector.load %arg17[%c0_40, %c0_41, %c0_42] : memref<2x32x32xf32, #tpu.memory_space<vmem>>, vector<1x32x32xf32>
    %81 = vector.shape_cast %80 : vector<1x32x32xf32> to vector<32x32xf32>
    %82 = vector.shape_cast %79 : vector<32x32xf32> to vector<1x32x32xf32>
    tpu.vector_store %arg17[%c0_40, %c0_41, %c0_42], %82 {strides = array<i32>} : memref<2x32x32xf32, #tpu.memory_space<vmem>>, vector<1x32x32xf32>,
    %83 = arith.truncf %79 : vector<32x32xf32> to vector<32x32xbf16>
    %cst_43 = arith.constant dense<0.000000e+00> : vector<32x32xf32>
    %84 = tpu.matmul %3, %83, %cst_43 {dimension_numbers = #tpu.dot_dimension_numbers<[1], [0], [0], [1], [0, 0, 1, 1], [], []>} : vector<32x32xbf16>, vector<32x32xbf16>, vector<32x32xf32> -> vector<32x32xf32>
    %85 = arith.truncf %84 : vector<32x32xf32> to vector<32x32xbf16>
    %cst_44 = arith.constant dense<0.000000e+00> : vector<32x32xf32>
    %86 = tpu.matmul %3, %85, %cst_44 {dimension_numbers = #tpu.dot_dimension_numbers<[1], [0], [0], [1], [0, 0, 1, 1], [], []>} : vector<32x32xbf16>, vector<32x32xbf16>, vector<32x32xf32> -> vector<32x32xf32>
    %cst_45 = arith.constant 2.000000e+00 : f32
    %87 = vector.broadcast %cst_45 : f32 to vector<32x32xf32>
    %88 = arith.mulf %87, %86 : vector<32x32xf32>
    %89 = arith.subf %88, %79 : vector<32x32xf32>
    %90 = tpu.concatenate %79, %84, %89 in 1 : vector<32x32xf32>, vector<32x32xf32>, vector<32x32xf32> -> vector<32x96xf32>
    %91 = arith.truncf %90 : vector<32x96xf32> to vector<32x96xbf16>
    %c0_46 = arith.constant 0 : index
    %c0_47 = arith.constant 0 : index
    %92 = vector.load %arg9[%c0_46, %c0_47] : memref<96x96xbf16, #tpu.memory_space<vmem>>, vector<96x96xbf16>
    %cst_48 = arith.constant dense<0.000000e+00> : vector<32x96xf32>
    %93 = tpu.matmul %91, %92, %cst_48 {dimension_numbers = #tpu.dot_dimension_numbers<[1], [0], [0], [1], [0, 0, 1, 1], [], []>} : vector<32x96xbf16>, vector<96x96xbf16>, vector<32x96xf32> -> vector<32x96xf32>
    %94 = vector.extract_strided_slice %93 {offsets = [0, 0], sizes = [32, 64], strides = [1, 1]} : vector<32x96xf32> to vector<32x64xf32>
    %95 = arith.addf %94, %35 : vector<32x64xf32>
    %96 = arith.negf %95 : vector<32x64xf32>
    %97 = math.exp %96 : vector<32x64xf32>
    %cst_49 = arith.constant 1.000000e+00 : f32
    %98 = vector.broadcast %cst_49 : f32 to vector<32x64xf32>
    %99 = arith.addf %98, %97 : vector<32x64xf32>
    %100 = arith.divf %98, %99 : vector<32x64xf32>
    %101 = vector.extract_strided_slice %100 {offsets = [0, 0], sizes = [32, 32], strides = [1, 1]} : vector<32x64xf32> to vector<32x32xf32>
    %102 = vector.extract_strided_slice %100 {offsets = [0, 32], sizes = [32, 32], strides = [1, 1]} : vector<32x64xf32> to vector<32x32xf32>
    %103 = arith.mulf %101, %7 : vector<32x32xf32>
    %104 = arith.truncf %103 : vector<32x32xf32> to vector<32x32xbf16>
    %cst_50 = arith.constant dense<0.000000e+00> : vector<32x32xf32>
    %105 = tpu.matmul %3, %104, %cst_50 {dimension_numbers = #tpu.dot_dimension_numbers<[1], [0], [0], [1], [0, 0, 1, 1], [], []>} : vector<32x32xbf16>, vector<32x32xbf16>, vector<32x32xf32> -> vector<32x32xf32>
    %106 = arith.truncf %105 : vector<32x32xf32> to vector<32x32xbf16>
    %cst_51 = arith.constant dense<0.000000e+00> : vector<32x32xf32>
    %107 = tpu.matmul %3, %106, %cst_51 {dimension_numbers = #tpu.dot_dimension_numbers<[1], [0], [0], [1], [0, 0, 1, 1], [], []>} : vector<32x32xbf16>, vector<32x32xbf16>, vector<32x32xf32> -> vector<32x32xf32>
    %cst_52 = arith.constant 2.000000e+00 : f32
    %108 = vector.broadcast %cst_52 : f32 to vector<32x32xf32>
    %109 = arith.mulf %108, %107 : vector<32x32xf32>
    %110 = arith.subf %109, %103 : vector<32x32xf32>
    %111 = tpu.concatenate %103, %105, %110 in 1 : vector<32x32xf32>, vector<32x32xf32>, vector<32x32xf32> -> vector<32x96xf32>
    %112 = arith.truncf %111 : vector<32x96xf32> to vector<32x96xbf16>
    %113 = vector.extract_strided_slice %93 {offsets = [0, 64], sizes = [32, 32], strides = [1, 1]} : vector<32x96xf32> to vector<32x32xf32>
    %c0_53 = arith.constant 0 : index
    %c0_54 = arith.constant 0 : index
    %114 = vector.load %arg11[%c0_53, %c0_54] : memref<96x32xbf16, #tpu.memory_space<vmem>>, vector<96x32xbf16>
    %cst_55 = arith.constant dense<0.000000e+00> : vector<32x32xf32>
    %115 = tpu.matmul %112, %114, %cst_55 {dimension_numbers = #tpu.dot_dimension_numbers<[1], [0], [0], [1], [0, 0, 1, 1], [], []>} : vector<32x96xbf16>, vector<96x32xbf16>, vector<32x32xf32> -> vector<32x32xf32>
    %116 = arith.addf %113, %115 : vector<32x32xf32>
    %c0_56 = arith.constant 0 : index
    %c0_57 = arith.constant 0 : index
    %117 = vector.load %arg13[%c0_56, %c0_57] : memref<1x32xf32, #tpu.memory_space<vmem>>, vector<1x32xf32>
    %118 = vector.broadcast %117 : vector<1x32xf32> to vector<32x32xf32>
    %119 = arith.addf %116, %118 : vector<32x32xf32>
    %120 = math.tanh %119 : vector<32x32xf32>
    %121 = arith.mulf %102, %7 : vector<32x32xf32>
    %cst_58 = arith.constant 1.000000e+00 : f32
    %122 = vector.broadcast %cst_58 : f32 to vector<32x32xf32>
    %123 = arith.subf %122, %102 : vector<32x32xf32>
    %124 = arith.mulf %123, %120 : vector<32x32xf32>
    %125 = arith.addf %121, %124 : vector<32x32xf32>
    %c1_59 = arith.constant 1 : index
    %c0_60 = arith.constant 0 : index
    %c0_61 = arith.constant 0 : index
    %126 = vector.load %arg17[%c1_59, %c0_60, %c0_61] : memref<2x32x32xf32, #tpu.memory_space<vmem>>, vector<1x32x32xf32>
    %127 = vector.shape_cast %126 : vector<1x32x32xf32> to vector<32x32xf32>
    %128 = vector.shape_cast %125 : vector<32x32xf32> to vector<1x32x32xf32>
    tpu.vector_store %arg17[%c1_59, %c0_60, %c0_61], %128 {strides = array<i32>} : memref<2x32x32xf32, #tpu.memory_space<vmem>>, vector<1x32x32xf32>,
    %129 = arith.truncf %125 : vector<32x32xf32> to vector<32x32xbf16>
    %c0_62 = arith.constant 0 : index
    %c0_63 = arith.constant 0 : index
    %130 = vector.load %arg14[%c0_62, %c0_63] : memref<32x8xbf16, #tpu.memory_space<vmem>>, vector<32x8xbf16>
    %cst_64 = arith.constant dense<0.000000e+00> : vector<32x8xf32>
    %131 = tpu.matmul %129, %130, %cst_64 {dimension_numbers = #tpu.dot_dimension_numbers<[1], [0], [0], [1], [0, 0, 1, 1], [], []>} : vector<32x32xbf16>, vector<32x8xbf16>, vector<32x8xf32> -> vector<32x8xf32>
    %c0_65 = arith.constant 0 : index
    %c0_66 = arith.constant 0 : index
    %132 = vector.load %arg15[%c0_65, %c0_66] : memref<1x8xf32, #tpu.memory_space<vmem>>, vector<1x8xf32>
    %133 = vector.broadcast %132 : vector<1x8xf32> to vector<32x8xf32>
    %134 = arith.addf %131, %133 : vector<32x8xf32>
    %c0_67 = arith.constant 0 : index
    %c0_68 = arith.constant 0 : index
    %c0_69 = arith.constant 0 : index
    %135 = vector.load %arg16[%c0_67, %c0_68, %c0_69] : memref<1x32x8xf32, #tpu.memory_space<vmem>>, vector<1x32x8xf32>
    %136 = vector.shape_cast %135 : vector<1x32x8xf32> to vector<32x8xf32>
    %137 = vector.shape_cast %134 : vector<32x8xf32> to vector<1x32x8xf32>
    tpu.vector_store %arg16[%c0_67, %c0_68, %c0_69], %137 {strides = array<i32>} : memref<1x32x8xf32, #tpu.memory_space<vmem>>, vector<1x32x8xf32>,
    %c0_70 = arith.constant 0 : index
    %c0_71 = arith.constant 0 : index
    %138 = vector.load %arg18[%c0_70, %c0_71] : memref<32x8xf32, #tpu.memory_space<vmem>>, vector<32x8xf32>
    tpu.vector_store %arg18[%c0_70, %c0_71], %134 {strides = array<i32>} : memref<32x8xf32, #tpu.memory_space<vmem>>, vector<32x8xf32>,
    return
  }
  func.func @transform_0(%arg0: i32) -> (i32, i32) {
    %c0_i32 = arith.constant 0 : i32
    %c0_i32_0 = arith.constant 0 : i32
    %c0_i32_1 = arith.constant 0 : i32
    return %c0_i32, %c0_i32_0 : i32, i32
  }
  func.func @transform_1(%arg0: i32) -> (i32, i32, i32) {
    %c0_i32 = arith.constant 0 : i32
    %c0_i32_0 = arith.constant 0 : i32
    %c0_i32_1 = arith.constant 0 : i32
    %c0_i32_2 = arith.constant 0 : i32
    return %c0_i32, %c0_i32_0, %c0_i32_1 : i32, i32, i32
  }
  func.func @transform_2(%arg0: i32) -> (i32, i32) {
    %c0_i32 = arith.constant 0 : i32
    %c0_i32_0 = arith.constant 0 : i32
    %c0_i32_1 = arith.constant 0 : i32
    return %c0_i32, %c0_i32_0 : i32, i32
  }
  func.func @transform_3(%arg0: i32) -> (i32, i32) {
    %c0_i32 = arith.constant 0 : i32
    %c0_i32_0 = arith.constant 0 : i32
    %c0_i32_1 = arith.constant 0 : i32
    return %c0_i32, %c0_i32_0 : i32, i32
  }
  func.func @transform_4(%arg0: i32) -> (i32, i32) {
    %c0_i32 = arith.constant 0 : i32
    %c0_i32_0 = arith.constant 0 : i32
    %c0_i32_1 = arith.constant 0 : i32
    return %c0_i32, %c0_i32_0 : i32, i32
  }
  func.func @transform_5(%arg0: i32) -> (i32, i32) {
    %c0_i32 = arith.constant 0 : i32
    %c0_i32_0 = arith.constant 0 : i32
    %c0_i32_1 = arith.constant 0 : i32
    return %c0_i32, %c0_i32_0 : i32, i32
  }
  func.func @transform_6(%arg0: i32) -> (i32, i32) {
    %c0_i32 = arith.constant 0 : i32
    %c0_i32_0 = arith.constant 0 : i32
    %c0_i32_1 = arith.constant 0 : i32
    return %c0_i32, %c0_i32_0 : i32, i32
  }
  func.func @transform_7(%arg0: i32) -> (i32, i32) {
    %c0_i32 = arith.constant 0 : i32
    %c0_i32_0 = arith.constant 0 : i32
    %c0_i32_1 = arith.constant 0 : i32
    return %c0_i32, %c0_i32_0 : i32, i32
  }
  func.func @transform_8(%arg0: i32) -> (i32, i32) {
    %c0_i32 = arith.constant 0 : i32
    %c0_i32_0 = arith.constant 0 : i32
    %c0_i32_1 = arith.constant 0 : i32
    return %c0_i32, %c0_i32_0 : i32, i32
  }
  func.func @transform_9(%arg0: i32) -> (i32, i32) {
    %c0_i32 = arith.constant 0 : i32
    %c0_i32_0 = arith.constant 0 : i32
    %c0_i32_1 = arith.constant 0 : i32
    return %c0_i32, %c0_i32_0 : i32, i32
  }
  func.func @transform_10(%arg0: i32) -> (i32, i32) {
    %c0_i32 = arith.constant 0 : i32
    %c0_i32_0 = arith.constant 0 : i32
    %c0_i32_1 = arith.constant 0 : i32
    return %c0_i32, %c0_i32_0 : i32, i32
  }
  func.func @transform_11(%arg0: i32) -> (i32, i32) {
    %c0_i32 = arith.constant 0 : i32
    %c0_i32_0 = arith.constant 0 : i32
    %c0_i32_1 = arith.constant 0 : i32
    return %c0_i32, %c0_i32_0 : i32, i32
  }
  func.func @transform_12(%arg0: i32) -> (i32, i32) {
    %c0_i32 = arith.constant 0 : i32
    %c0_i32_0 = arith.constant 0 : i32
    %c0_i32_1 = arith.constant 0 : i32
    return %c0_i32, %c0_i32_0 : i32, i32
  }
  func.func @transform_13(%arg0: i32) -> (i32, i32) {
    %c0_i32 = arith.constant 0 : i32
    %c0_i32_0 = arith.constant 0 : i32
    %c0_i32_1 = arith.constant 0 : i32
    return %c0_i32, %c0_i32_0 : i32, i32
  }
  func.func @transform_14(%arg0: i32) -> (i32, i32) {
    %c0_i32 = arith.constant 0 : i32
    %c0_i32_0 = arith.constant 0 : i32
    %c0_i32_1 = arith.constant 0 : i32
    return %c0_i32, %c0_i32_0 : i32, i32
  }
  func.func @transform_15(%arg0: i32) -> (i32, i32, i32) {
    %c0_i32 = arith.constant 0 : i32
    %c0_i32_0 = arith.constant 0 : i32
    %c0_i32_1 = arith.constant 0 : i32
    return %arg0, %c0_i32, %c0_i32_0 : i32, i32, i32
  }
  func.func @transform_16(%arg0: i32) -> (i32, i32, i32) {
    %c0_i32 = arith.constant 0 : i32
    %c0_i32_0 = arith.constant 0 : i32
    %c0_i32_1 = arith.constant 0 : i32
    %c0_i32_2 = arith.constant 0 : i32
    return %c0_i32, %c0_i32_0, %c0_i32_1 : i32, i32, i32
  }
}

</mosaic_0001>

<llo_original>
// kernel: _decoder_run.1
$region0: #{_decoder_run.1}
  #allocation0 [shape = 'u32[]', space=smem, size = 0x4, offset = 0x4, fixed_abs, tag = 'smem constant byte address 0x4 - core index']
  #allocation1 [shape = 'u32[144,128]{1,0:T(1,128)}', space=vmem, size = 0x12000, scoped, tag = 'internal scratch']
  #allocation2 [shape = 'f32[32,8]{1,0:T(8,128)}', space=vmem, size = 0x4000, scoped, tag = 'scratch operand']
  %s0 = inlined_call_operand.vmem [shape: f32[32,8], index: 0, kind: input, shape index: {}]
  %s1 = inlined_call_operand.vmem [shape: f32[2,32,32], index: 1, kind: input, shape index: {}, may-alias: {1,16}]
  %s2 = inlined_call_operand.vmem [shape: bf16[32,32], index: 2, kind: input, shape index: {}]
  %s3 = inlined_call_operand.vmem [shape: bf16[24,96], index: 3, kind: input, shape index: {}]
  %s4 = inlined_call_operand.vmem [shape: bf16[96,64], index: 4, kind: input, shape index: {}]
  %s5 = inlined_call_operand.vmem [shape: bf16[96,32], index: 5, kind: input, shape index: {}]
  %s6 = inlined_call_operand.vmem [shape: f32[1,64], index: 6, kind: input, shape index: {}]
  %s7 = inlined_call_operand.vmem [shape: f32[1,32], index: 7, kind: input, shape index: {}]
  %s8 = inlined_call_operand.vmem [shape: bf16[96,96], index: 8, kind: input, shape index: {}]
  %s9 = inlined_call_operand.vmem [shape: bf16[96,64], index: 9, kind: input, shape index: {}]
  %s10 = inlined_call_operand.vmem [shape: bf16[96,32], index: 10, kind: input, shape index: {}]
  %s11 = inlined_call_operand.vmem [shape: f32[1,64], index: 11, kind: input, shape index: {}]
  %s12 = inlined_call_operand.vmem [shape: f32[1,32], index: 12, kind: input, shape index: {}]
  %s13 = inlined_call_operand.vmem [shape: bf16[32,8], index: 13, kind: input, shape index: {}]
  %s14 = inlined_call_operand.vmem [shape: f32[1,8], index: 14, kind: input, shape index: {}]
  %s15 = inlined_call_operand.vmem [shape: f32[1,32,8], index: 15, kind: output, shape index: {0}]
  %s16 = inlined_call_operand.vmem [shape: f32[2,32,32], index: 16, kind: output, shape index: {1}, may-alias: {1,16}]
  %17 = xla_tuple %s15, %s16
  %s18 = sld [smem:[#allocation0]]
  $region82: #{_decoder_run.1} parent=0
    _
  %s20 = ssub.s32 1, %s18
  %s21 = scalar_select 0, %s20, %s18
  // Predicated region
  $region2: #{_decoder_run.1} parent=0 // pred_check
    _
  $region3: #{_decoder_run.1} parent=0 // pred_check_branch
    %23 = sbr.rel (0) target = $region5
  $region4: #{_decoder_run.1} parent=0 // pred_region
    _
  $region5: #{_decoder_run.1} parent=0 // pred_fallthru
    _
  // Predicated region
  $region6: #{_decoder_run.1} parent=0 // pred_check
    _
  $region7: #{_decoder_run.1} parent=0 // pred_check_branch
    %25 = sbr.rel (0) target = $region9
  $region8: #{_decoder_run.1} parent=0 // pred_region
    _
  $region9: #{_decoder_run.1} parent=0 // pred_fallthru
    _
  // Predicated region
  $region10: #{_decoder_run.1} parent=0 // pred_check
    _
  $region11: #{_decoder_run.1} parent=0 // pred_check_branch
    %27 = sbr.rel (0) target = $region13
  $region12: #{_decoder_run.1} parent=0 // pred_region
    _
  $region13: #{_decoder_run.1} parent=0 // pred_fallthru
    _
  // Predicated region
  $region14: #{_decoder_run.1} parent=0 // pred_check
    _
  $region15: #{_decoder_run.1} parent=0 // pred_check_branch
    %29 = sbr.rel (0) target = $region17
  $region16: #{_decoder_run.1} parent=0 // pred_region
    _
  $region17: #{_decoder_run.1} parent=0 // pred_fallthru
    _
  // Predicated region
  $region18: #{_decoder_run.1} parent=0 // pred_check
    _
  $region19: #{_decoder_run.1} parent=0 // pred_check_branch
    %31 = sbr.rel (0) target = $region21
  $region20: #{_decoder_run.1} parent=0 // pred_region
    _
  $region21: #{_decoder_run.1} parent=0 // pred_fallthru
    _
  // Predicated region
  $region22: #{_decoder_run.1} parent=0 // pred_check
    _
  $region23: #{_decoder_run.1} parent=0 // pred_check_branch
    %33 = sbr.rel (0) target = $region25
  $region24: #{_decoder_run.1} parent=0 // pred_region
    _
  $region25: #{_decoder_run.1} parent=0 // pred_fallthru
    _
  // Predicated region
  $region26: #{_decoder_run.1} parent=0 // pred_check
    _
  $region27: #{_decoder_run.1} parent=0 // pred_check_branch
    %35 = sbr.rel (0) target = $region29
  $region28: #{_decoder_run.1} parent=0 // pred_region
    _
  $region29: #{_decoder_run.1} parent=0 // pred_fallthru
    _
  // Predicated region
  $region30: #{_decoder_run.1} parent=0 // pred_check
    _
  $region31: #{_decoder_run.1} parent=0 // pred_check_branch
    %37 = sbr.rel (0) target = $region33
  $region32: #{_decoder_run.1} parent=0 // pred_region
    _
  $region33: #{_decoder_run.1} parent=0 // pred_fallthru
    _
  // Predicated region
  $region34: #{_decoder_run.1} parent=0 // pred_check
    _
  $region35: #{_decoder_run.1} parent=0 // pred_check_branch
    %39 = sbr.rel (0) target = $region37
  $region36: #{_decoder_run.1} parent=0 // pred_region
    _
  $region37: #{_decoder_run.1} parent=0 // pred_fallthru
    _
  // Predicated region
  $region38: #{_decoder_run.1} parent=0 // pred_check
    _
  $region39: #{_decoder_run.1} parent=0 // pred_check_branch
    %41 = sbr.rel (0) target = $region41
  $region40: #{_decoder_run.1} parent=0 // pred_region
    _
  $region41: #{_decoder_run.1} parent=0 // pred_fallthru
    _
  // Predicated region
  $region42: #{_decoder_run.1} parent=0 // pred_check
    _
  $region43: #{_decoder_run.1} parent=0 // pred_check_branch
    %43 = sbr.rel (0) target = $region45
  $region44: #{_decoder_run.1} parent=0 // pred_region
    _
  $region45: #{_decoder_run.1} parent=0 // pred_fallthru
    _
  // Predicated region
  $region46: #{_decoder_run.1} parent=0 // pred_check
    _
  $region47: #{_decoder_run.1} parent=0 // pred_check_branch
    %45 = sbr.rel (0) target = $region49
  $region48: #{_decoder_run.1} parent=0 // pred_region
    _
  $region49: #{_decoder_run.1} parent=0 // pred_fallthru
    _
  // Predicated region
  $region50: #{_decoder_run.1} parent=0 // pred_check
    _
  $region51: #{_decoder_run.1} parent=0 // pred_check_branch
    %47 = sbr.rel (0) target = $region53
  $region52: #{_decoder_run.1} parent=0 // pred_region
    _
  $region53: #{_decoder_run.1} parent=0 // pred_fallthru
    _
  // Predicated region
  $region54: #{_decoder_run.1} parent=0 // pred_check
    _
  $region55: #{_decoder_run.1} parent=0 // pred_check_branch
    %49 = sbr.rel (0) target = $region57
  $region56: #{_decoder_run.1} parent=0 // pred_region
    _
  $region57: #{_decoder_run.1} parent=0 // pred_fallthru
    _
  // Predicated region
  $region58: #{_decoder_run.1} parent=0 // pred_check
    _
  $region59: #{_decoder_run.1} parent=0 // pred_check_branch
    %51 = sbr.rel (0) target = $region61
  $region60: #{_decoder_run.1} parent=0 // pred_region
    _
  $region61: #{_decoder_run.1} parent=0 // pred_fallthru
    _
  %p53 = scmp.eq.s32.totalorder 0, 0
  // Predicated region
  $region62: #{_decoder_run.1} parent=0 // pred_check
    %p54 = pneg %p53
  $region63: #{_decoder_run.1} parent=0 // pred_check_branch
    %56 = sbr.rel (%p54) target = $region65
  $region64: #{_decoder_run.1} parent=0 // pred_region
    %v57 = vld [vmem:[%s1] sm:$0xff]
    %v58 = vld [vmem:[%s1 + $0x8] sm:$0xff]
    %v59 = vld [vmem:[%s1 + $0x10] sm:$0xff]
    %v60 = vld [vmem:[%s1 + $0x18] sm:$0xff]
    %v61 = vld [vmem:[%s1 + $0x20] sm:$0xff]
    %v62 = vld [vmem:[%s1 + $0x28] sm:$0xff]
    %v63 = vld [vmem:[%s1 + $0x30] sm:$0xff]
    %v64 = vld [vmem:[%s1 + $0x38] sm:$0xff]
    %vm65 = vcmask 261120
    %66 = vst.msk [vmem:[%s16] sm:$0xff] %vm65, %v57
    %67 = vst.msk [vmem:[%s16 + $0x8] sm:$0xff] %vm65, %v58
    %68 = vst.msk [vmem:[%s16 + $0x10] sm:$0xff] %vm65, %v59
    %69 = vst.msk [vmem:[%s16 + $0x18] sm:$0xff] %vm65, %v60
    %70 = vst.msk [vmem:[%s16 + $0x20] sm:$0xff] %vm65, %v61
    %71 = vst.msk [vmem:[%s16 + $0x28] sm:$0xff] %vm65, %v62
    %72 = vst.msk [vmem:[%s16 + $0x30] sm:$0xff] %vm65, %v63
    %73 = vst.msk [vmem:[%s16 + $0x38] sm:$0xff] %vm65, %v64
    %v74 = vld [vmem:[%s0] sm:$0xff]
    %v75 = vld [vmem:[%s0 + $0x8] sm:$0xff]
    %v76 = vld [vmem:[%s0 + $0x10] sm:$0xff]
    %v77 = vld [vmem:[%s0 + $0x18] sm:$0xff]
    %vm78 = vcmask 64512
    %79 = vst.msk [vmem:[#allocation2] sm:$0xff] %vm78, %v74
    %80 = vst.msk [vmem:[#allocation2 + $0x8] sm:$0xff] %vm78, %v75
    %81 = vst.msk [vmem:[#allocation2 + $0x10] sm:$0xff] %vm78, %v76
    %82 = vst.msk [vmem:[#allocation2 + $0x18] sm:$0xff] %vm78, %v77
  $region65: #{_decoder_run.1} parent=0 // pred_fallthru
    _
  %v83 = vld [vmem:[%s2] sm:$0xf]
  %v84 = vld [vmem:[%s2 + $0x4] sm:$0xf]
  %v85 = vld [vmem:[%s2 + $0x8] sm:$0xf]
  %v86 = vld [vmem:[%s2 + $0xc] sm:$0xf]
  %v87 = vld [vmem:[%s16] sm:$0xff]
  %v88 = vld [vmem:[%s16 + $0x8] sm:$0xff]
  %v89 = vld [vmem:[%s16 + $0x10] sm:$0xff]
  %v90 = vld [vmem:[%s16 + $0x18] sm:$0xff]
  %s91 = scalar_lea.vmem %s16, 32
  %v92 = vld [vmem:[%s91] sm:$0xff]
  %v93 = vld [vmem:[%s91 + $0x8] sm:$0xff]
  %v94 = vld [vmem:[%s91 + $0x10] sm:$0xff]
  %v95 = vld [vmem:[%s91 + $0x18] sm:$0xff]
  %v96 = vpack.c.bf16 %v88, %v87
  %v97 = vpack.c.bf16 %v90, %v89
  %v102 = vunpack.c.l.b16 %v83
  %v103 = vunpack.c.l.b16 %v84
  %v104 = vunpack.c.l.b16 %v85
  %v105 = vunpack.c.l.b16 %v86
  %v106 = vpack.c.b16 %v103, %v102
  %v107 = vpack.c.b16 %v105, %v104
  %vm108 = vcmask 261120
  %v110 = vsel %vm108, %v106, 0
  %v113 = vsel %vm108, %v107, 0
  %115 = vmatprep.subr.bf16.mxu0 0
  %116 = vmatpush1.bf16.msra.mxu0 %v96
  %117 = vmatprep.subr.bf16.mxu0 0
  %118 = vmatpush1.bf16.msra.mxu0 %v97
  %119 = vmatprep.subr.bf16.mxu0 0
  %120 = vmatpush1.bf16.msra.mxu0 0
  %121 = vmatprep.subr.bf16.mxu0 0
  %122 = vmatpush1.bf16.msra.mxu0 0
  %123 = vmatprep.subr.bf16.mxu0 0
  %124 = vmatpush1.bf16.msra.mxu0 0
  %125 = vmatprep.subr.bf16.mxu0 0
  %126 = vmatpush1.bf16.msra.mxu0 0
  %127 = vmatprep.subr.bf16.mxu0 0
  %128 = vmatpush1.bf16.msra.mxu0 0
  %129 = vmatprep.subr.bf16.mxu0 0
  %130 = vmatpush1.bf16.msra.mxu0 0
  %131 = vmatprep.subr.bf16.mxu0 0
  %132 = vmatpush1.bf16.msra.mxu0 0
  %133 = vmatprep.subr.bf16.mxu0 0
  %134 = vmatpush1.bf16.msra.mxu0 0
  %135 = vmatprep.subr.bf16.mxu0 0
  %136 = vmatpush1.bf16.msra.mxu0 0
  %137 = vmatprep.subr.bf16.mxu0 0
  %138 = vmatpush1.bf16.msra.mxu0 0
  %139 = vmatprep.subr.bf16.mxu0 0
  %140 = vmatpush1.bf16.msra.mxu0 0
  %141 = vmatprep.subr.bf16.mxu0 0
  %142 = vmatpush1.bf16.msra.mxu0 0
  %143 = vmatprep.subr.bf16.mxu0 0
  %144 = vmatpush1.bf16.msra.mxu0 0
  %145 = vmatprep.subr.bf16.mxu0 0
  %146 = vmatpush1.bf16.msra.mxu0 0
  %147 = vmatprep.mubr.bf16.mxu0 0
  %148 = vmatmul.mubr.bf16.gmra.mrb[0].mxu0 %v110
  %v149 = vpop.f32.mrb[0].mxu0
  %v150 = vadd.f32 0.0, %v149
  %v151 = vpop.f32.mrb[0].mxu0
  %v152 = vpop.f32.mrb[0].mxu0
  %v153 = vadd.f32 0.0, %v152
  %v154 = vpop.f32.mrb[0].mxu0
  %155 = vmatprep.mubr.bf16.mxu0 0
  %156 = vmatmul.mubr.bf16.gmra.mrb[0].mxu0 %v113
  %v157 = vpop.f32.mrb[0].mxu0
  %v158 = vadd.f32 0.0, %v157
  %v159 = vpop.f32.mrb[0].mxu0
  %v160 = vpop.f32.mrb[0].mxu0
  %v161 = vadd.f32 0.0, %v160
  %v162 = vpop.f32.mrb[0].mxu0
  %163 = vdwg.mxu0
  %v164 = vpack.c.bf16 %v153, %v150
  %v165 = vpack.c.bf16 %v161, %v158
  %166 = vmatprep.subr.bf16.mxu0 0
  %167 = vmatpush1.bf16.msra.mxu0 %v164
  %168 = vmatprep.subr.bf16.mxu0 0
  %169 = vmatpush1.bf16.msra.mxu0 %v165
  %170 = vmatprep.subr.bf16.mxu0 0
  %171 = vmatpush1.bf16.msra.mxu0 0
  %172 = vmatprep.subr.bf16.mxu0 0
  %173 = vmatpush1.bf16.msra.mxu0 0
  %174 = vmatprep.subr.bf16.mxu0 0
  %175 = vmatpush1.bf16.msra.mxu0 0
  %176 = vmatprep.subr.bf16.mxu0 0
  %177 = vmatpush1.bf16.msra.mxu0 0
  %178 = vmatprep.subr.bf16.mxu0 0
  %179 = vmatpush1.bf16.msra.mxu0 0
  %180 = vmatprep.subr.bf16.mxu0 0
  %181 = vmatpush1.bf16.msra.mxu0 0
  %182 = vmatprep.subr.bf16.mxu0 0
  %183 = vmatpush1.bf16.msra.mxu0 0
  %184 = vmatprep.subr.bf16.mxu0 0
  %185 = vmatpush1.bf16.msra.mxu0 0
  %186 = vmatprep.subr.bf16.mxu0 0
  %187 = vmatpush1.bf16.msra.mxu0 0
  %188 = vmatprep.subr.bf16.mxu0 0
  %189 = vmatpush1.bf16.msra.mxu0 0
  %190 = vmatprep.subr.bf16.mxu0 0
  %191 = vmatpush1.bf16.msra.mxu0 0
  %192 = vmatprep.subr.bf16.mxu0 0
  %193 = vmatpush1.bf16.msra.mxu0 0
  %194 = vmatprep.subr.bf16.mxu0 0
  %195 = vmatpush1.bf16.msra.mxu0 0
  %196 = vmatprep.subr.bf16.mxu0 0
  %197 = vmatpush1.bf16.msra.mxu0 0
  %198 = vmatprep.mubr.bf16.mxu0 0
  %199 = vmatmul.mubr.bf16.gmra.mrb[0].mxu0 %v110
  %v200 = vpop.f32.mrb[0].mxu0
  %v201 = vadd.f32 0.0, %v200
  %v202 = vpop.f32.mrb[0].mxu0
  %v203 = vpop.f32.mrb[0].mxu0
  %v204 = vadd.f32 0.0, %v203
  %v205 = vpop.f32.mrb[0].mxu0
  %206 = vmatprep.mubr.bf16.mxu0 0
  %207 = vmatmul.mubr.bf16.gmra.mrb[0].mxu0 %v113
  %v208 = vpop.f32.mrb[0].mxu0
  %v209 = vadd.f32 0.0, %v208
  %v210 = vpop.f32.mrb[0].mxu0
  %v211 = vpop.f32.mrb[0].mxu0
  %v212 = vadd.f32 0.0, %v211
  %v213 = vpop.f32.mrb[0].mxu0
  %214 = vdwg.mxu0
  %v215 = vmul.f32 %v201, 2.0
  %v216 = vmul.f32 %v204, 2.0
  %v217 = vmul.f32 %v209, 2.0
  %v218 = vmul.f32 %v212, 2.0
  %v219 = vsub.f32 %v215, %v87
  %v220 = vsub.f32 %v216, %v88
  %v221 = vsub.f32 %v217, %v89
  %v222 = vsub.f32 %v218, %v90
  %227 = vrot.lane.b32.xlu0 %v150, 32
  %v228 = vpop.permute.xlu0 %227
  %229 = vrot.lane.b32.xlu0 %v153, 32
  %v230 = vpop.permute.xlu0 %229
  %231 = vrot.lane.b32.xlu0 %v158, 32
  %v232 = vpop.permute.xlu0 %231
  %233 = vrot.lane.b32.xlu0 %v161, 32
  %v234 = vpop.permute.xlu0 %233
  %243 = vrot.lane.b32.xlu0 %v219, 64
  %v244 = vpop.permute.xlu0 %243
  %245 = vrot.lane.b32.xlu0 %v220, 64
  %v246 = vpop.permute.xlu0 %245
  %247 = vrot.lane.b32.xlu0 %v221, 64
  %v248 = vpop.permute.xlu0 %247
  %249 = vrot.lane.b32.xlu0 %v222, 64
  %v250 = vpop.permute.xlu0 %249
  %v255 = vsel %vm108, %v87, %v228
  %v256 = vsel %vm108, %v88, %v230
  %v257 = vsel %vm108, %v89, %v232
  %v258 = vsel %vm108, %v90, %v234
  %vm259 = vcmask 523264
  %v260 = vsel %vm259, %v255, %v244
  %v261 = vsel %vm259, %v256, %v246
  %v262 = vsel %vm259, %v257, %v248
  %v263 = vsel %vm259, %v258, %v250
  %v264 = vpack.c.bf16 %v261, %v260
  %v265 = vpack.c.bf16 %v263, %v262
  %v266 = vld [vmem:[%s4] sm:$0xf]
  %v267 = vld [vmem:[%s4 + $0x4] sm:$0xf]
  %v268 = vld [vmem:[%s4 + $0x8] sm:$0xf]
  %v269 = vld [vmem:[%s4 + $0xc] sm:$0xf]
  %v270 = vld [vmem:[%s4 + $0x10] sm:$0xf]
  %v271 = vld [vmem:[%s4 + $0x14] sm:$0xf]
  %v272 = vld [vmem:[%s4 + $0x18] sm:$0xf]
  %v273 = vld [vmem:[%s4 + $0x1c] sm:$0xf]
  %v274 = vld [vmem:[%s4 + $0x20] sm:$0xf]
  %v275 = vld [vmem:[%s4 + $0x24] sm:$0xf]
  %v276 = vld [vmem:[%s4 + $0x28] sm:$0xf]
  %v277 = vld [vmem:[%s4 + $0x2c] sm:$0xf]
  %v278 = vld [vmem:[%s6] sm:$0x1]
  %v280 = vlaneseq
  %v281 = vshrl.u32 %v280, 7
  %v282 = vsub.s32 0, %v281
  %v283 = vrot.slane %v278, %v282
  %v297 = vunpack.c.l.b16 %v266
  %v298 = vunpack.c.l.b16 %v267
  %v299 = vunpack.c.l.b16 %v268
  %v300 = vunpack.c.l.b16 %v269
  %v301 = vunpack.c.l.b16 %v270
  %v302 = vunpack.c.l.b16 %v271
  %v303 = vunpack.c.l.b16 %v272
  %v304 = vunpack.c.l.b16 %v273
  %v305 = vunpack.c.l.b16 %v274
  %v306 = vunpack.c.l.b16 %v275
  %v307 = vunpack.c.l.b16 %v276
  %v308 = vunpack.c.l.b16 %v277
  %v309 = vpack.c.b16 %v298, %v297
  %v310 = vpack.c.b16 %v300, %v299
  %v311 = vpack.c.b16 %v302, %v301
  %v312 = vpack.c.b16 %v304, %v303
  %v313 = vpack.c.b16 %v306, %v305
  %v314 = vpack.c.b16 %v308, %v307
  %vm321 = vcmask 785408
  %v323 = vsel %vm321, %v264, 0
  %v326 = vsel %vm321, %v265, 0
  %328 = vmatprep.subr.bf16.mxu0 0
  %329 = vmatpush1.bf16.msra.mxu0 %v309
  %330 = vmatprep.subr.bf16.mxu0 0
  %331 = vmatpush1.bf16.msra.mxu0 %v310
  %332 = vmatprep.subr.bf16.mxu0 0
  %333 = vmatpush1.bf16.msra.mxu0 %v311
  %334 = vmatprep.subr.bf16.mxu0 0
  %335 = vmatpush1.bf16.msra.mxu0 %v312
  %336 = vmatprep.subr.bf16.mxu0 0
  %337 = vmatpush1.bf16.msra.mxu0 %v313
  %338 = vmatprep.subr.bf16.mxu0 0
  %339 = vmatpush1.bf16.msra.mxu0 %v314
  %340 = vmatprep.subr.bf16.mxu0 0
  %341 = vmatpush1.bf16.msra.mxu0 0
  %342 = vmatprep.subr.bf16.mxu0 0
  %343 = vmatpush1.bf16.msra.mxu0 0
  %344 = vmatprep.subr.bf16.mxu0 0
  %345 = vmatpush1.bf16.msra.mxu0 0
  %346 = vmatprep.subr.bf16.mxu0 0
  %347 = vmatpush1.bf16.msra.mxu0 0
  %348 = vmatprep.subr.bf16.mxu0 0
  %349 = vmatpush1.bf16.msra.mxu0 0
  %350 = vmatprep.subr.bf16.mxu0 0
  %351 = vmatpush1.bf16.msra.mxu0 0
  %352 = vmatprep.subr.bf16.mxu0 0
  %353 = vmatpush1.bf16.msra.mxu0 0
  %354 = vmatprep.subr.bf16.mxu0 0
  %355 = vmatpush1.bf16.msra.mxu0 0
  %356 = vmatprep.subr.bf16.mxu0 0
  %357 = vmatpush1.bf16.msra.mxu0 0
  %358 = vmatprep.subr.bf16.mxu0 0
  %359 = vmatpush1.bf16.msra.mxu0 0
  %360 = vmatprep.mubr.bf16.mxu0 0
  %361 = vmatmul.mubr.bf16.gmra.mrb[0].mxu0 %v323
  %v362 = vpop.f32.mrb[0].mxu0
  %v363 = vadd.f32 %v283, %v362
  %v364 = vpop.f32.mrb[0].mxu0
  %v365 = vpop.f32.mrb[0].mxu0
  %v366 = vadd.f32 %v283, %v365
  %v367 = vpop.f32.mrb[0].mxu0
  %368 = vmatprep.mubr.bf16.mxu0 0
  %369 = vmatmul.mubr.bf16.gmra.mrb[0].mxu0 %v326
  %v370 = vpop.f32.mrb[0].mxu0
  %v371 = vadd.f32 %v283, %v370
  %v372 = vpop.f32.mrb[0].mxu0
  %v373 = vpop.f32.mrb[0].mxu0
  %v374 = vadd.f32 %v283, %v373
  %v375 = vpop.f32.mrb[0].mxu0
  %376 = vdwg.mxu0
  %v377 = vpack.c.bf16 %v93, %v92
  %v378 = vpack.c.bf16 %v95, %v94
  %379 = vmatprep.subr.bf16.mxu0 0
  %380 = vmatpush1.bf16.msra.mxu0 %v377
  %381 = vmatprep.subr.bf16.mxu0 0
  %382 = vmatpush1.bf16.msra.mxu0 %v378
  %383 = vmatprep.subr.bf16.mxu0 0
  %384 = vmatpush1.bf16.msra.mxu0 0
  %385 = vmatprep.subr.bf16.mxu0 0
  %386 = vmatpush1.bf16.msra.mxu0 0
  %387 = vmatprep.subr.bf16.mxu0 0
  %388 = vmatpush1.bf16.msra.mxu0 0
  %389 = vmatprep.subr.bf16.mxu0 0
  %390 = vmatpush1.bf16.msra.mxu0 0
  %391 = vmatprep.subr.bf16.mxu0 0
  %392 = vmatpush1.bf16.msra.mxu0 0
  %393 = vmatprep.subr.bf16.mxu0 0
  %394 = vmatpush1.bf16.msra.mxu0 0
  %395 = vmatprep.subr.bf16.mxu0 0
  %396 = vmatpush1.bf16.msra.mxu0 0
  %397 = vmatprep.subr.bf16.mxu0 0
  %398 = vmatpush1.bf16.msra.mxu0 0
  %399 = vmatprep.subr.bf16.mxu0 0
  %400 = vmatpush1.bf16.msra.mxu0 0
  %401 = vmatprep.subr.bf16.mxu0 0
  %402 = vmatpush1.bf16.msra.mxu0 0
  %403 = vmatprep.subr.bf16.mxu0 0
  %404 = vmatpush1.bf16.msra.mxu0 0
  %405 = vmatprep.subr.bf16.mxu0 0
  %406 = vmatpush1.bf16.msra.mxu0 0
  %407 = vmatprep.subr.bf16.mxu0 0
  %408 = vmatpush1.bf16.msra.mxu0 0
  %409 = vmatprep.subr.bf16.mxu0 0
  %410 = vmatpush1.bf16.msra.mxu0 0
  %411 = vmatprep.mubr.bf16.mxu0 0
  %412 = vmatmul.mubr.bf16.gmra.mrb[0].mxu0 %v110
  %v413 = vpop.f32.mrb[0].mxu0
  %v414 = vadd.f32 0.0, %v413
  %v415 = vpop.f32.mrb[0].mxu0
  %v416 = vpop.f32.mrb[0].mxu0
  %v417 = vadd.f32 0.0, %v416
  %v418 = vpop.f32.mrb[0].mxu0
  %419 = vmatprep.mubr.bf16.mxu0 0
  %420 = vmatmul.mubr.bf16.gmra.mrb[0].mxu0 %v113
  %v421 = vpop.f32.mrb[0].mxu0
  %v422 = vadd.f32 0.0, %v421
  %v423 = vpop.f32.mrb[0].mxu0
  %v424 = vpop.f32.mrb[0].mxu0
  %v425 = vadd.f32 0.0, %v424
  %v426 = vpop.f32.mrb[0].mxu0
  %427 = vdwg.mxu0
  %v428 = vpack.c.bf16 %v417, %v414
  %v429 = vpack.c.bf16 %v425, %v422
  %430 = vmatprep.subr.bf16.mxu0 0
  %431 = vmatpush1.bf16.msra.mxu0 %v428
  %432 = vmatprep.subr.bf16.mxu0 0
  %433 = vmatpush1.bf16.msra.mxu0 %v429
  %434 = vmatprep.subr.bf16.mxu0 0
  %435 = vmatpush1.bf16.msra.mxu0 0
  %436 = vmatprep.subr.bf16.mxu0 0
  %437 = vmatpush1.bf16.msra.mxu0 0
  %438 = vmatprep.subr.bf16.mxu0 0
  %439 = vmatpush1.bf16.msra.mxu0 0
  %440 = vmatprep.subr.bf16.mxu0 0
  %441 = vmatpush1.bf16.msra.mxu0 0
  %442 = vmatprep.subr.bf16.mxu0 0
  %443 = vmatpush1.bf16.msra.mxu0 0
  %444 = vmatprep.subr.bf16.mxu0 0
  %445 = vmatpush1.bf16.msra.mxu0 0
  %446 = vmatprep.subr.bf16.mxu0 0
  %447 = vmatpush1.bf16.msra.mxu0 0
  %448 = vmatprep.subr.bf16.mxu0 0
  %449 = vmatpush1.bf16.msra.mxu0 0
  %450 = vmatprep.subr.bf16.mxu0 0
  %451 = vmatpush1.bf16.msra.mxu0 0
  %452 = vmatprep.subr.bf16.mxu0 0
  %453 = vmatpush1.bf16.msra.mxu0 0
  %454 = vmatprep.subr.bf16.mxu0 0
  %455 = vmatpush1.bf16.msra.mxu0 0
  %456 = vmatprep.subr.bf16.mxu0 0
  %457 = vmatpush1.bf16.msra.mxu0 0
  %458 = vmatprep.subr.bf16.mxu0 0
  %459 = vmatpush1.bf16.msra.mxu0 0
  %460 = vmatprep.subr.bf16.mxu0 0
  %461 = vmatpush1.bf16.msra.mxu0 0
  %462 = vmatprep.mubr.bf16.mxu0 0
  %463 = vmatmul.mubr.bf16.gmra.mrb[0].mxu0 %v110
  %v464 = vpop.f32.mrb[0].mxu0
  %v465 = vadd.f32 0.0, %v464
  %v466 = vpop.f32.mrb[0].mxu0
  %v467 = vpop.f32.mrb[0].mxu0
  %v468 = vadd.f32 0.0, %v467
  %v469 = vpop.f32.mrb[0].mxu0
  %470 = vmatprep.mubr.bf16.mxu0 0
  %471 = vmatmul.mubr.bf16.gmra.mrb[0].mxu0 %v113
  %v472 = vpop.f32.mrb[0].mxu0
  %v473 = vadd.f32 0.0, %v472
  %v474 = vpop.f32.mrb[0].mxu0
  %v475 = vpop.f32.mrb[0].mxu0
  %v476 = vadd.f32 0.0, %v475
  %v477 = vpop.f32.mrb[0].mxu0
  %478 = vdwg.mxu0
  %v479 = vmul.f32 %v465, 2.0
  %v480 = vmul.f32 %v468, 2.0
  %v481 = vmul.f32 %v473, 2.0
  %v482 = vmul.f32 %v476, 2.0
  %v483 = vsub.f32 %v479, %v92
  %v484 = vsub.f32 %v480, %v93
  %v485 = vsub.f32 %v481, %v94
  %v486 = vsub.f32 %v482, %v95
  %491 = vrot.lane.b32.xlu0 %v414, 32
  %v492 = vpop.permute.xlu0 %491
  %493 = vrot.lane.b32.xlu0 %v417, 32
  %v494 = vpop.permute.xlu0 %493
  %495 = vrot.lane.b32.xlu0 %v422, 32
  %v496 = vpop.permute.xlu0 %495
  %497 = vrot.lane.b32.xlu0 %v425, 32
  %v498 = vpop.permute.xlu0 %497
  %507 = vrot.lane.b32.xlu0 %v483, 64
  %v508 = vpop.permute.xlu0 %507
  %509 = vrot.lane.b32.xlu0 %v484, 64
  %v510 = vpop.permute.xlu0 %509
  %511 = vrot.lane.b32.xlu0 %v485, 64
  %v512 = vpop.permute.xlu0 %511
  %513 = vrot.lane.b32.xlu0 %v486, 64
  %v514 = vpop.permute.xlu0 %513
  %v519 = vsel %vm108, %v92, %v492
  %v520 = vsel %vm108, %v93, %v494
  %v521 = vsel %vm108, %v94, %v496
  %v522 = vsel %vm108, %v95, %v498
  %v523 = vsel %vm259, %v519, %v508
  %v524 = vsel %vm259, %v520, %v510
  %v525 = vsel %vm259, %v521, %v512
  %v526 = vsel %vm259, %v522, %v514
  %v527 = vpack.c.bf16 %v524, %v523
  %v528 = vpack.c.bf16 %v526, %v525
  %v529 = vld [vmem:[%s9] sm:$0xf]
  %v530 = vld [vmem:[%s9 + $0x4] sm:$0xf]
  %v531 = vld [vmem:[%s9 + $0x8] sm:$0xf]
  %v532 = vld [vmem:[%s9 + $0xc] sm:$0xf]
  %v533 = vld [vmem:[%s9 + $0x10] sm:$0xf]
  %v534 = vld [vmem:[%s9 + $0x14] sm:$0xf]
  %v535 = vld [vmem:[%s9 + $0x18] sm:$0xf]
  %v536 = vld [vmem:[%s9 + $0x1c] sm:$0xf]
  %v537 = vld [vmem:[%s9 + $0x20] sm:$0xf]
  %v538 = vld [vmem:[%s9 + $0x24] sm:$0xf]
  %v539 = vld [vmem:[%s9 + $0x28] sm:$0xf]
  %v540 = vld [vmem:[%s9 + $0x2c] sm:$0xf]
  %v541 = vld [vmem:[%s11] sm:$0x1]
  %v543 = vlaneseq
  %v544 = vshrl.u32 %v543, 7
  %v545 = vsub.s32 0, %v544
  %v546 = vrot.slane %v541, %v545
  %v560 = vunpack.c.l.b16 %v529
  %v561 = vunpack.c.l.b16 %v530
  %v562 = vunpack.c.l.b16 %v531
  %v563 = vunpack.c.l.b16 %v532
  %v564 = vunpack.c.l.b16 %v533
  %v565 = vunpack.c.l.b16 %v534
  %v566 = vunpack.c.l.b16 %v535
  %v567 = vunpack.c.l.b16 %v536
  %v568 = vunpack.c.l.b16 %v537
  %v569 = vunpack.c.l.b16 %v538
  %v570 = vunpack.c.l.b16 %v539
  %v571 = vunpack.c.l.b16 %v540
  %v572 = vpack.c.b16 %v561, %v560
  %v573 = vpack.c.b16 %v563, %v562
  %v574 = vpack.c.b16 %v565, %v564
  %v575 = vpack.c.b16 %v567, %v566
  %v576 = vpack.c.b16 %v569, %v568
  %v577 = vpack.c.b16 %v571, %v570
  %v585 = vsel %vm321, %v527, 0
  %v588 = vsel %vm321, %v528, 0
  %590 = vmatprep.subr.bf16.mxu0 0
  %591 = vmatpush1.bf16.msra.mxu0 %v572
  %592 = vmatprep.subr.bf16.mxu0 0
  %593 = vmatpush1.bf16.msra.mxu0 %v573
  %594 = vmatprep.subr.bf16.mxu0 0
  %595 = vmatpush1.bf16.msra.mxu0 %v574
  %596 = vmatprep.subr.bf16.mxu0 0
  %597 = vmatpush1.bf16.msra.mxu0 %v575
  %598 = vmatprep.subr.bf16.mxu0 0
  %599 = vmatpush1.bf16.msra.mxu0 %v576
  %600 = vmatprep.subr.bf16.mxu0 0
  %601 = vmatpush1.bf16.msra.mxu0 %v577
  %602 = vmatprep.subr.bf16.mxu0 0
  %603 = vmatpush1.bf16.msra.mxu0 0
  %604 = vmatprep.subr.bf16.mxu0 0
  %605 = vmatpush1.bf16.msra.mxu0 0
  %606 = vmatprep.subr.bf16.mxu0 0
  %607 = vmatpush1.bf16.msra.mxu0 0
  %608 = vmatprep.subr.bf16.mxu0 0
  %609 = vmatpush1.bf16.msra.mxu0 0
  %610 = vmatprep.subr.bf16.mxu0 0
  %611 = vmatpush1.bf16.msra.mxu0 0
  %612 = vmatprep.subr.bf16.mxu0 0
  %613 = vmatpush1.bf16.msra.mxu0 0
  %614 = vmatprep.subr.bf16.mxu0 0
  %615 = vmatpush1.bf16.msra.mxu0 0
  %616 = vmatprep.subr.bf16.mxu0 0
  %617 = vmatpush1.bf16.msra.mxu0 0
  %618 = vmatprep.subr.bf16.mxu0 0
  %619 = vmatpush1.bf16.msra.mxu0 0
  %620 = vmatprep.subr.bf16.mxu0 0
  %621 = vmatpush1.bf16.msra.mxu0 0
  %622 = vmatprep.mubr.bf16.mxu0 0
  %623 = vmatmul.mubr.bf16.gmra.mrb[0].mxu0 %v585
  %v624 = vpop.f32.mrb[0].mxu0
  %v625 = vadd.f32 %v546, %v624
  %v626 = vpop.f32.mrb[0].mxu0
  %v627 = vpop.f32.mrb[0].mxu0
  %v628 = vadd.f32 %v546, %v627
  %v629 = vpop.f32.mrb[0].mxu0
  %630 = vmatprep.mubr.bf16.mxu0 0
  %631 = vmatmul.mubr.bf16.gmra.mrb[0].mxu0 %v588
  %v632 = vpop.f32.mrb[0].mxu0
  %v633 = vadd.f32 %v546, %v632
  %v634 = vpop.f32.mrb[0].mxu0
  %v635 = vpop.f32.mrb[0].mxu0
  %v636 = vadd.f32 %v546, %v635
  %v637 = vpop.f32.mrb[0].mxu0
  %638 = vdwg.mxu0
  %v639 = vld [vmem:[#allocation2] sm:$0xff]
  %v640 = vld [vmem:[#allocation2 + $0x8] sm:$0xff]
  %v641 = vld [vmem:[#allocation2 + $0x10] sm:$0xff]
  %v642 = vld [vmem:[#allocation2 + $0x18] sm:$0xff]
  %v643 = vpack.c.bf16 %v640, %v639
  %v644 = vpack.c.bf16 %v642, %v641
  %645 = vmatprep.subr.bf16.mxu0 0
  %646 = vmatpush1.bf16.msra.mxu0 %v643
  %647 = vmatprep.subr.bf16.mxu0 0
  %648 = vmatpush1.bf16.msra.mxu0 %v644
  %649 = vmatprep.subr.bf16.mxu0 0
  %650 = vmatpush1.bf16.msra.mxu0 0
  %651 = vmatprep.subr.bf16.mxu0 0
  %652 = vmatpush1.bf16.msra.mxu0 0
  %653 = vmatprep.subr.bf16.mxu0 0
  %654 = vmatpush1.bf16.msra.mxu0 0
  %655 = vmatprep.subr.bf16.mxu0 0
  %656 = vmatpush1.bf16.msra.mxu0 0
  %657 = vmatprep.subr.bf16.mxu0 0
  %658 = vmatpush1.bf16.msra.mxu0 0
  %659 = vmatprep.subr.bf16.mxu0 0
  %660 = vmatpush1.bf16.msra.mxu0 0
  %661 = vmatprep.subr.bf16.mxu0 0
  %662 = vmatpush1.bf16.msra.mxu0 0
  %663 = vmatprep.subr.bf16.mxu0 0
  %664 = vmatpush1.bf16.msra.mxu0 0
  %665 = vmatprep.subr.bf16.mxu0 0
  %666 = vmatpush1.bf16.msra.mxu0 0
  %667 = vmatprep.subr.bf16.mxu0 0
  %668 = vmatpush1.bf16.msra.mxu0 0
  %669 = vmatprep.subr.bf16.mxu0 0
  %670 = vmatpush1.bf16.msra.mxu0 0
  %671 = vmatprep.subr.bf16.mxu0 0
  %672 = vmatpush1.bf16.msra.mxu0 0
  %673 = vmatprep.subr.bf16.mxu0 0
  %674 = vmatpush1.bf16.msra.mxu0 0
  %675 = vmatprep.subr.bf16.mxu0 0
  %676 = vmatpush1.bf16.msra.mxu0 0
  %677 = vmatprep.mubr.bf16.mxu0 0
  %678 = vmatmul.mubr.bf16.gmra.mrb[0].mxu0 %v110
  %v679 = vpop.f32.mrb[0].mxu0
  %v680 = vadd.f32 0.0, %v679
  %v681 = vpop.f32.mrb[0].mxu0
  %v682 = vpop.f32.mrb[0].mxu0
  %v683 = vadd.f32 0.0, %v682
  %v684 = vpop.f32.mrb[0].mxu0
  %685 = vmatprep.mubr.bf16.mxu0 0
  %686 = vmatmul.mubr.bf16.gmra.mrb[0].mxu0 %v113
  %v687 = vpop.f32.mrb[0].mxu0
  %v688 = vadd.f32 0.0, %v687
  %v689 = vpop.f32.mrb[0].mxu0
  %v690 = vpop.f32.mrb[0].mxu0
  %v691 = vadd.f32 0.0, %v690
  %v692 = vpop.f32.mrb[0].mxu0
  %693 = vdwg.mxu0
  %v694 = vpack.c.bf16 %v683, %v680
  %v695 = vpack.c.bf16 %v691, %v688
  %696 = vmatprep.subr.bf16.mxu0 0
  %697 = vmatpush1.bf16.msra.mxu0 %v694
  %698 = vmatprep.subr.bf16.mxu0 0
  %699 = vmatpush1.bf16.msra.mxu0 %v695
  %700 = vmatprep.subr.bf16.mxu0 0
  %701 = vmatpush1.bf16.msra.mxu0 0
  %702 = vmatprep.subr.bf16.mxu0 0
  %703 = vmatpush1.bf16.msra.mxu0 0
  %704 = vmatprep.subr.bf16.mxu0 0
  %705 = vmatpush1.bf16.msra.mxu0 0
  %706 = vmatprep.subr.bf16.mxu0 0
  %707 = vmatpush1.bf16.msra.mxu0 0
  %708 = vmatprep.subr.bf16.mxu0 0
  %709 = vmatpush1.bf16.msra.mxu0 0
  %710 = vmatprep.subr.bf16.mxu0 0
  %711 = vmatpush1.bf16.msra.mxu0 0
  %712 = vmatprep.subr.bf16.mxu0 0
  %713 = vmatpush1.bf16.msra.mxu0 0
  %714 = vmatprep.subr.bf16.mxu0 0
  %715 = vmatpush1.bf16.msra.mxu0 0
  %716 = vmatprep.subr.bf16.mxu0 0
  %717 = vmatpush1.bf16.msra.mxu0 0
  %718 = vmatprep.subr.bf16.mxu0 0
  %719 = vmatpush1.bf16.msra.mxu0 0
  %720 = vmatprep.subr.bf16.mxu0 0
  %721 = vmatpush1.bf16.msra.mxu0 0
  %722 = vmatprep.subr.bf16.mxu0 0
  %723 = vmatpush1.bf16.msra.mxu0 0
  %724 = vmatprep.subr.bf16.mxu0 0
  %725 = vmatpush1.bf16.msra.mxu0 0
  %726 = vmatprep.subr.bf16.mxu0 0
  %727 = vmatpush1.bf16.msra.mxu0 0
  %728 = vmatprep.mubr.bf16.mxu0 0
  %729 = vmatmul.mubr.bf16.gmra.mrb[0].mxu0 %v110
  %v730 = vpop.f32.mrb[0].mxu0
  %v731 = vadd.f32 0.0, %v730
  %v732 = vpop.f32.mrb[0].mxu0
  %v733 = vpop.f32.mrb[0].mxu0
  %v734 = vadd.f32 0.0, %v733
  %v735 = vpop.f32.mrb[0].mxu0
  %736 = vmatprep.mubr.bf16.mxu0 0
  %737 = vmatmul.mubr.bf16.gmra.mrb[0].mxu0 %v113
  %v738 = vpop.f32.mrb[0].mxu0
  %v739 = vadd.f32 0.0, %v738
  %v740 = vpop.f32.mrb[0].mxu0
  %v741 = vpop.f32.mrb[0].mxu0
  %v742 = vadd.f32 0.0, %v741
  %v743 = vpop.f32.mrb[0].mxu0
  %744 = vdwg.mxu0
  %v745 = vmul.f32 %v731, 2.0
  %v746 = vmul.f32 %v734, 2.0
  %v747 = vmul.f32 %v739, 2.0
  %v748 = vmul.f32 %v742, 2.0
  %v749 = vsub.f32 %v745, %v639
  %v750 = vsub.f32 %v746, %v640
  %v751 = vsub.f32 %v747, %v641
  %v752 = vsub.f32 %v748, %v642
  %757 = vrot.lane.b32.xlu0 %v680, 8
  %v758 = vpop.permute.xlu0 %757
  %759 = vrot.lane.b32.xlu0 %v683, 8
  %v760 = vpop.permute.xlu0 %759
  %761 = vrot.lane.b32.xlu0 %v688, 8
  %v762 = vpop.permute.xlu0 %761
  %763 = vrot.lane.b32.xlu0 %v691, 8
  %v764 = vpop.permute.xlu0 %763
  %773 = vrot.lane.b32.xlu0 %v749, 16
  %v774 = vpop.permute.xlu0 %773
  %775 = vrot.lane.b32.xlu0 %v750, 16
  %v776 = vpop.permute.xlu0 %775
  %777 = vrot.lane.b32.xlu0 %v751, 16
  %v778 = vpop.permute.xlu0 %777
  %779 = vrot.lane.b32.xlu0 %v752, 16
  %v780 = vpop.permute.xlu0 %779
  %vm785 = vcmask 64512
  %v786 = vsel %vm785, %v639, %v758
  %v787 = vsel %vm785, %v640, %v760
  %v788 = vsel %vm785, %v641, %v762
  %v789 = vsel %vm785, %v642, %v764
  %vm790 = vcmask 130048
  %v791 = vsel %vm790, %v786, %v774
  %v792 = vsel %vm790, %v787, %v776
  %v793 = vsel %vm790, %v788, %v778
  %v794 = vsel %vm790, %v789, %v780
  %v795 = vpack.c.bf16 %v792, %v791
  %v796 = vpack.c.bf16 %v794, %v793
  %v797 = vld [vmem:[%s3] sm:$0xf]
  %v798 = vld [vmem:[%s3 + $0x4] sm:$0xf]
  %v799 = vld [vmem:[%s3 + $0x8] sm:$0xf]
  %v803 = vunpack.c.l.b16 %v797
  %v804 = vunpack.c.l.b16 %v798
  %v805 = vunpack.c.l.b16 %v799
  %v806 = vpack.c.b16 %v804, %v803
  %v807 = vpack.c.b16 %v805, %v805
  %vm809 = vcmask 195584
  %v811 = vsel %vm809, %v795, 0
  %v814 = vsel %vm809, %v796, 0
  %vm816 = vcmask 1043456
  %v818 = vsel %vm816, %v807, 0
  %820 = vmatprep.subr.bf16.mxu0 0
  %821 = vmatpush1.bf16.msra.mxu0 %v806
  %822 = vmatprep.subr.bf16.mxu0 0
  %823 = vmatpush1.bf16.msra.mxu0 %v818
  %824 = vmatprep.subr.bf16.mxu0 0
  %825 = vmatpush1.bf16.msra.mxu0 0
  %826 = vmatprep.subr.bf16.mxu0 0
  %827 = vmatpush1.bf16.msra.mxu0 0
  %828 = vmatprep.subr.bf16.mxu0 0
  %829 = vmatpush1.bf16.msra.mxu0 0
  %830 = vmatprep.subr.bf16.mxu0 0
  %831 = vmatpush1.bf16.msra.mxu0 0
  %832 = vmatprep.subr.bf16.mxu0 0
  %833 = vmatpush1.bf16.msra.mxu0 0
  %834 = vmatprep.subr.bf16.mxu0 0
  %835 = vmatpush1.bf16.msra.mxu0 0
  %836 = vmatprep.subr.bf16.mxu0 0
  %837 = vmatpush1.bf16.msra.mxu0 0
  %838 = vmatprep.subr.bf16.mxu0 0
  %839 = vmatpush1.bf16.msra.mxu0 0
  %840 = vmatprep.subr.bf16.mxu0 0
  %841 = vmatpush1.bf16.msra.mxu0 0
  %842 = vmatprep.subr.bf16.mxu0 0
  %843 = vmatpush1.bf16.msra.mxu0 0
  %844 = vmatprep.subr.bf16.mxu0 0
  %845 = vmatpush1.bf16.msra.mxu0 0
  %846 = vmatprep.subr.bf16.mxu0 0
  %847 = vmatpush1.bf16.msra.mxu0 0
  %848 = vmatprep.subr.bf16.mxu0 0
  %849 = vmatpush1.bf16.msra.mxu0 0
  %850 = vmatprep.subr.bf16.mxu0 0
  %851 = vmatpush1.bf16.msra.mxu0 0
  %852 = vmatprep.mubr.bf16.mxu0 0
  %853 = vmatmul.mubr.bf16.gmra.mrb[0].mxu0 %v811
  %v854 = vpop.f32.mrb[0].mxu0
  %v855 = vadd.f32 0.0, %v854
  %v856 = vpop.f32.mrb[0].mxu0
  %v857 = vpop.f32.mrb[0].mxu0
  %v858 = vadd.f32 0.0, %v857
  %v859 = vpop.f32.mrb[0].mxu0
  %860 = vmatprep.mubr.bf16.mxu0 0
  %861 = vmatmul.mubr.bf16.gmra.mrb[0].mxu0 %v814
  %v862 = vpop.f32.mrb[0].mxu0
  %v863 = vadd.f32 0.0, %v862
  %v864 = vpop.f32.mrb[0].mxu0
  %v865 = vpop.f32.mrb[0].mxu0
  %v866 = vadd.f32 0.0, %v865
  %v867 = vpop.f32.mrb[0].mxu0
  %868 = vdwg.mxu0
  %v869 = vadd.f32 %v855, %v363
  %v870 = vadd.f32 %v858, %v366
  %v871 = vadd.f32 %v863, %v371
  %v872 = vadd.f32 %v866, %v374
  %v873 = vxor.u32 %v869, 2147483648
  %v874 = vxor.u32 %v870, 2147483648
  %v875 = vxor.u32 %v871, 2147483648
  %v876 = vxor.u32 %v872, 2147483648
  %v877 = vmul.f32 %v873, 1.442695
  %v878 = vpow.pop %v877
  %v879 = vmul.f32 %v874, 1.442695
  %v880 = vpow.pop %v879
  %v881 = vmul.f32 %v875, 1.442695
  %v882 = vpow.pop %v881
  %v883 = vmul.f32 %v876, 1.442695
  %v884 = vpow.pop %v883
  %v885 = vadd.f32 %v878, 1.0
  %v886 = vadd.f32 %v880, 1.0
  %v887 = vadd.f32 %v882, 1.0
  %v888 = vadd.f32 %v884, 1.0
  %v889 = vrcp.pop %v885
  %v890 = vmul.f32 1.0, %v889
  %v891 = vrcp.pop %v886
  %v892 = vmul.f32 1.0, %v891
  %v893 = vrcp.pop %v887
  %v894 = vmul.f32 1.0, %v893
  %v895 = vrcp.pop %v888
  %v896 = vmul.f32 1.0, %v895
  %v897 = vmul.f32 %v890, %v87
  %v898 = vmul.f32 %v892, %v88
  %v899 = vmul.f32 %v894, %v89
  %v900 = vmul.f32 %v896, %v90
  %v901 = vpack.c.bf16 %v898, %v897
  %v902 = vpack.c.bf16 %v900, %v899
  %903 = vmatprep.subr.bf16.mxu0 0
  %904 = vmatpush1.bf16.msra.mxu0 %v901
  %905 = vmatprep.subr.bf16.mxu0 0
  %906 = vmatpush1.bf16.msra.mxu0 %v902
  %907 = vmatprep.subr.bf16.mxu0 0
  %908 = vmatpush1.bf16.msra.mxu0 0
  %909 = vmatprep.subr.bf16.mxu0 0
  %910 = vmatpush1.bf16.msra.mxu0 0
  %911 = vmatprep.subr.bf16.mxu0 0
  %912 = vmatpush1.bf16.msra.mxu0 0
  %913 = vmatprep.subr.bf16.mxu0 0
  %914 = vmatpush1.bf16.msra.mxu0 0
  %915 = vmatprep.subr.bf16.mxu0 0
  %916 = vmatpush1.bf16.msra.mxu0 0
  %917 = vmatprep.subr.bf16.mxu0 0
  %918 = vmatpush1.bf16.msra.mxu0 0
  %919 = vmatprep.subr.bf16.mxu0 0
  %920 = vmatpush1.bf16.msra.mxu0 0
  %921 = vmatprep.subr.bf16.mxu0 0
  %922 = vmatpush1.bf16.msra.mxu0 0
  %923 = vmatprep.subr.bf16.mxu0 0
  %924 = vmatpush1.bf16.msra.mxu0 0
  %925 = vmatprep.subr.bf16.mxu0 0
  %926 = vmatpush1.bf16.msra.mxu0 0
  %927 = vmatprep.subr.bf16.mxu0 0
  %928 = vmatpush1.bf16.msra.mxu0 0
  %929 = vmatprep.subr.bf16.mxu0 0
  %930 = vmatpush1.bf16.msra.mxu0 0
  %931 = vmatprep.subr.bf16.mxu0 0
  %932 = vmatpush1.bf16.msra.mxu0 0
  %933 = vmatprep.subr.bf16.mxu0 0
  %934 = vmatpush1.bf16.msra.mxu0 0
  %935 = vmatprep.mubr.bf16.mxu0 0
  %936 = vmatmul.mubr.bf16.gmra.mrb[0].mxu0 %v110
  %v937 = vpop.f32.mrb[0].mxu0
  %v938 = vadd.f32 0.0, %v937
  %v939 = vpop.f32.mrb[0].mxu0
  %v940 = vpop.f32.mrb[0].mxu0
  %v941 = vadd.f32 0.0, %v940
  %v942 = vpop.f32.mrb[0].mxu0
  %943 = vmatprep.mubr.bf16.mxu0 0
  %944 = vmatmul.mubr.bf16.gmra.mrb[0].mxu0 %v113
  %v945 = vpop.f32.mrb[0].mxu0
  %v946 = vadd.f32 0.0, %v945
  %v947 = vpop.f32.mrb[0].mxu0
  %v948 = vpop.f32.mrb[0].mxu0
  %v949 = vadd.f32 0.0, %v948
  %v950 = vpop.f32.mrb[0].mxu0
  %951 = vdwg.mxu0
  %v952 = vpack.c.bf16 %v941, %v938
  %v953 = vpack.c.bf16 %v949, %v946
  %954 = vmatprep.subr.bf16.mxu0 0
  %955 = vmatpush1.bf16.msra.mxu0 %v952
  %956 = vmatprep.subr.bf16.mxu0 0
  %957 = vmatpush1.bf16.msra.mxu0 %v953
  %958 = vmatprep.subr.bf16.mxu0 0
  %959 = vmatpush1.bf16.msra.mxu0 0
  %960 = vmatprep.subr.bf16.mxu0 0
  %961 = vmatpush1.bf16.msra.mxu0 0
  %962 = vmatprep.subr.bf16.mxu0 0
  %963 = vmatpush1.bf16.msra.mxu0 0
  %964 = vmatprep.subr.bf16.mxu0 0
  %965 = vmatpush1.bf16.msra.mxu0 0
  %966 = vmatprep.subr.bf16.mxu0 0
  %967 = vmatpush1.bf16.msra.mxu0 0
  %968 = vmatprep.subr.bf16.mxu0 0
  %969 = vmatpush1.bf16.msra.mxu0 0
  %970 = vmatprep.subr.bf16.mxu0 0
  %971 = vmatpush1.bf16.msra.mxu0 0
  %972 = vmatprep.subr.bf16.mxu0 0
  %973 = vmatpush1.bf16.msra.mxu0 0
  %974 = vmatprep.subr.bf16.mxu0 0
  %975 = vmatpush1.bf16.msra.mxu0 0
  %976 = vmatprep.subr.bf16.mxu0 0
  %977 = vmatpush1.bf16.msra.mxu0 0
  %978 = vmatprep.subr.bf16.mxu0 0
  %979 = vmatpush1.bf16.msra.mxu0 0
  %980 = vmatprep.subr.bf16.mxu0 0
  %981 = vmatpush1.bf16.msra.mxu0 0
  %982 = vmatprep.subr.bf16.mxu0 0
  %983 = vmatpush1.bf16.msra.mxu0 0
  %984 = vmatprep.subr.bf16.mxu0 0
  %985 = vmatpush1.bf16.msra.mxu0 0
  %986 = vmatprep.mubr.bf16.mxu0 0
  %987 = vmatmul.mubr.bf16.gmra.mrb[0].mxu0 %v110
  %v988 = vpop.f32.mrb[0].mxu0
  %v989 = vadd.f32 0.0, %v988
  %v990 = vpop.f32.mrb[0].mxu0
  %v991 = vpop.f32.mrb[0].mxu0
  %v992 = vadd.f32 0.0, %v991
  %v993 = vpop.f32.mrb[0].mxu0
  %994 = vmatprep.mubr.bf16.mxu0 0
  %995 = vmatmul.mubr.bf16.gmra.mrb[0].mxu0 %v113
  %v996 = vpop.f32.mrb[0].mxu0
  %v997 = vadd.f32 0.0, %v996
  %v998 = vpop.f32.mrb[0].mxu0
  %v999 = vpop.f32.mrb[0].mxu0
  %v1000 = vadd.f32 0.0, %v999
  %v1001 = vpop.f32.mrb[0].mxu0
  %1002 = vdwg.mxu0
  %v1003 = vmul.f32 %v989, 2.0
  %v1004 = vmul.f32 %v992, 2.0
  %v1005 = vmul.f32 %v997, 2.0
  %v1006 = vmul.f32 %v1000, 2.0
  %v1007 = vsub.f32 %v1003, %v897
  %v1008 = vsub.f32 %v1004, %v898
  %v1009 = vsub.f32 %v1005, %v899
  %v1010 = vsub.f32 %v1006, %v900
  %1015 = vrot.lane.b32.xlu0 %v938, 32
  %v1016 = vpop.permute.xlu0 %1015
  %1017 = vrot.lane.b32.xlu0 %v941, 32
  %v1018 = vpop.permute.xlu0 %1017
  %1019 = vrot.lane.b32.xlu0 %v946, 32
  %v1020 = vpop.permute.xlu0 %1019
  %1021 = vrot.lane.b32.xlu0 %v949, 32
  %v1022 = vpop.permute.xlu0 %1021
  %1031 = vrot.lane.b32.xlu0 %v1007, 64
  %v1032 = vpop.permute.xlu0 %1031
  %1033 = vrot.lane.b32.xlu0 %v1008, 64
  %v1034 = vpop.permute.xlu0 %1033
  %1035 = vrot.lane.b32.xlu0 %v1009, 64
  %v1036 = vpop.permute.xlu0 %1035
  %1037 = vrot.lane.b32.xlu0 %v1010, 64
  %v1038 = vpop.permute.xlu0 %1037
  %v1043 = vsel %vm108, %v897, %v1016
  %v1044 = vsel %vm108, %v898, %v1018
  %v1045 = vsel %vm108, %v899, %v1020
  %v1046 = vsel %vm108, %v900, %v1022
  %v1047 = vsel %vm259, %v1043, %v1032
  %v1048 = vsel %vm259, %v1044, %v1034
  %v1049 = vsel %vm259, %v1045, %v1036
  %v1050 = vsel %vm259, %v1046, %v1038
  %v1051 = vpack.c.bf16 %v1048, %v1047
  %v1052 = vpack.c.bf16 %v1050, %v1049
  %v1053 = vld [vmem:[%s5] sm:$0xf]
  %v1054 = vld [vmem:[%s5 + $0x4] sm:$0xf]
  %v1055 = vld [vmem:[%s5 + $0x8] sm:$0xf]
  %v1056 = vld [vmem:[%s5 + $0xc] sm:$0xf]
  %v1057 = vld [vmem:[%s5 + $0x10] sm:$0xf]
  %v1058 = vld [vmem:[%s5 + $0x14] sm:$0xf]
  %v1059 = vld [vmem:[%s5 + $0x18] sm:$0xf]
  %v1060 = vld [vmem:[%s5 + $0x1c] sm:$0xf]
  %v1061 = vld [vmem:[%s5 + $0x20] sm:$0xf]
  %v1062 = vld [vmem:[%s5 + $0x24] sm:$0xf]
  %v1063 = vld [vmem:[%s5 + $0x28] sm:$0xf]
  %v1064 = vld [vmem:[%s5 + $0x2c] sm:$0xf]
  %v1077 = vunpack.c.l.b16 %v1053
  %v1078 = vunpack.c.l.b16 %v1054
  %v1079 = vunpack.c.l.b16 %v1055
  %v1080 = vunpack.c.l.b16 %v1056
  %v1081 = vunpack.c.l.b16 %v1057
  %v1082 = vunpack.c.l.b16 %v1058
  %v1083 = vunpack.c.l.b16 %v1059
  %v1084 = vunpack.c.l.b16 %v1060
  %v1085 = vunpack.c.l.b16 %v1061
  %v1086 = vunpack.c.l.b16 %v1062
  %v1087 = vunpack.c.l.b16 %v1063
  %v1088 = vunpack.c.l.b16 %v1064
  %v1089 = vpack.c.b16 %v1078, %v1077
  %v1090 = vpack.c.b16 %v1080, %v1079
  %v1091 = vpack.c.b16 %v1082, %v1081
  %v1092 = vpack.c.b16 %v1084, %v1083
  %v1093 = vpack.c.b16 %v1086, %v1085
  %v1094 = vpack.c.b16 %v1088, %v1087
  %v1102 = vsel %vm321, %v1051, 0
  %v1105 = vsel %vm321, %v1052, 0
  %1107 = vmatprep.subr.bf16.mxu0 0
  %1108 = vmatpush1.bf16.msra.mxu0 %v1089
  %1109 = vmatprep.subr.bf16.mxu0 0
  %1110 = vmatpush1.bf16.msra.mxu0 %v1090
  %1111 = vmatprep.subr.bf16.mxu0 0
  %1112 = vmatpush1.bf16.msra.mxu0 %v1091
  %1113 = vmatprep.subr.bf16.mxu0 0
  %1114 = vmatpush1.bf16.msra.mxu0 %v1092
  %1115 = vmatprep.subr.bf16.mxu0 0
  %1116 = vmatpush1.bf16.msra.mxu0 %v1093
  %1117 = vmatprep.subr.bf16.mxu0 0
  %1118 = vmatpush1.bf16.msra.mxu0 %v1094
  %1119 = vmatprep.subr.bf16.mxu0 0
  %1120 = vmatpush1.bf16.msra.mxu0 0
  %1121 = vmatprep.subr.bf16.mxu0 0
  %1122 = vmatpush1.bf16.msra.mxu0 0
  %1123 = vmatprep.subr.bf16.mxu0 0
  %1124 = vmatpush1.bf16.msra.mxu0 0
  %1125 = vmatprep.subr.bf16.mxu0 0
  %1126 = vmatpush1.bf16.msra.mxu0 0
  %1127 = vmatprep.subr.bf16.mxu0 0
  %1128 = vmatpush1.bf16.msra.mxu0 0
  %1129 = vmatprep.subr.bf16.mxu0 0
  %1130 = vmatpush1.bf16.msra.mxu0 0
  %1131 = vmatprep.subr.bf16.mxu0 0
  %1132 = vmatpush1.bf16.msra.mxu0 0
  %1133 = vmatprep.subr.bf16.mxu0 0
  %1134 = vmatpush1.bf16.msra.mxu0 0
  %1135 = vmatprep.subr.bf16.mxu0 0
  %1136 = vmatpush1.bf16.msra.mxu0 0
  %1137 = vmatprep.subr.bf16.mxu0 0
  %1138 = vmatpush1.bf16.msra.mxu0 0
  %1139 = vmatprep.mubr.bf16.mxu0 0
  %1140 = vmatmul.mubr.bf16.gmra.mrb[0].mxu0 %v1102
  %v1141 = vpop.f32.mrb[0].mxu0
  %v1142 = vadd.f32 0.0, %v1141
  %v1143 = vpop.f32.mrb[0].mxu0
  %v1144 = vpop.f32.mrb[0].mxu0
  %v1145 = vadd.f32 0.0, %v1144
  %v1146 = vpop.f32.mrb[0].mxu0
  %1147 = vmatprep.mubr.bf16.mxu0 0
  %1148 = vmatmul.mubr.bf16.gmra.mrb[0].mxu0 %v1105
  %v1149 = vpop.f32.mrb[0].mxu0
  %v1150 = vadd.f32 0.0, %v1149
  %v1151 = vpop.f32.mrb[0].mxu0
  %v1152 = vpop.f32.mrb[0].mxu0
  %v1153 = vadd.f32 0.0, %v1152
  %v1154 = vpop.f32.mrb[0].mxu0
  %1155 = vdwg.mxu0
  %1160 = vrot.lane.b32.xlu0 %v1142, 64
  %v1161 = vpop.permute.xlu0 %1160
  %1162 = vrot.lane.b32.xlu0 %v1145, 64
  %v1163 = vpop.permute.xlu0 %1162
  %1164 = vrot.lane.b32.xlu0 %v1150, 64
  %v1165 = vpop.permute.xlu0 %1164
  %1166 = vrot.lane.b32.xlu0 %v1153, 64
  %v1167 = vpop.permute.xlu0 %1166
  %v1172 = vadd.f32 %v855, %v1161
  %v1173 = vadd.f32 %v858, %v1163
  %v1174 = vadd.f32 %v863, %v1165
  %v1175 = vadd.f32 %v866, %v1167
  %v1176 = vld [vmem:[%s7] sm:$0x1]
  %v1178 = vlaneseq
  %v1179 = vshrl.u32 %v1178, 7
  %v1180 = vsub.s32 0, %v1179
  %v1181 = vrot.slane %v1176, %v1180
  %1182 = vrot.lane.b32.xlu0 %v1181, 64
  %v1183 = vpop.permute.xlu0 %1182
  %v1185 = vadd.f32 %v1172, %v1183
  %v1186 = vadd.f32 %v1173, %v1183
  %v1187 = vadd.f32 %v1174, %v1183
  %v1188 = vadd.f32 %v1175, %v1183
  %v1189 = vtanh.pop %v1185
  %v1190 = vtanh.pop %v1186
  %v1191 = vtanh.pop %v1187
  %v1192 = vtanh.pop %v1188
  %1197 = vrot.lane.b32.xlu0 %v87, 32
  %v1198 = vpop.permute.xlu0 %1197
  %1199 = vrot.lane.b32.xlu0 %v88, 32
  %v1200 = vpop.permute.xlu0 %1199
  %1201 = vrot.lane.b32.xlu0 %v89, 32
  %v1202 = vpop.permute.xlu0 %1201
  %1203 = vrot.lane.b32.xlu0 %v90, 32
  %v1204 = vpop.permute.xlu0 %1203
  %v1209 = vmul.f32 %v890, %v1198
  %v1210 = vmul.f32 %v892, %v1200
  %v1211 = vmul.f32 %v894, %v1202
  %v1212 = vmul.f32 %v896, %v1204
  %v1213 = vsub.f32 1.0, %v890
  %v1214 = vsub.f32 1.0, %v892
  %v1215 = vsub.f32 1.0, %v894
  %v1216 = vsub.f32 1.0, %v896
  %1221 = vrot.lane.b32.xlu0 %v1189, 96
  %v1222 = vpop.permute.xlu0 %1221
  %1223 = vrot.lane.b32.xlu0 %v1190, 96
  %v1224 = vpop.permute.xlu0 %1223
  %1225 = vrot.lane.b32.xlu0 %v1191, 96
  %v1226 = vpop.permute.xlu0 %1225
  %1227 = vrot.lane.b32.xlu0 %v1192, 96
  %v1228 = vpop.permute.xlu0 %1227
  %v1233 = vmul.f32 %v1213, %v1222
  %v1234 = vmul.f32 %v1214, %v1224
  %v1235 = vmul.f32 %v1215, %v1226
  %v1236 = vmul.f32 %v1216, %v1228
  %v1237 = vadd.f32 %v1209, %v1233
  %v1238 = vadd.f32 %v1210, %v1234
  %v1239 = vadd.f32 %v1211, %v1235
  %v1240 = vadd.f32 %v1212, %v1236
  %1245 = vrot.lane.b32.xlu0 %v1237, 96
  %v1246 = vpop.permute.xlu0 %1245
  %1247 = vrot.lane.b32.xlu0 %v1238, 96
  %v1248 = vpop.permute.xlu0 %1247
  %1249 = vrot.lane.b32.xlu0 %v1239, 96
  %v1250 = vpop.permute.xlu0 %1249
  %1251 = vrot.lane.b32.xlu0 %v1240, 96
  %v1252 = vpop.permute.xlu0 %1251
  %1257 = vst.msk [vmem:[%s16] sm:$0xff] %vm108, %v1246
  %1258 = vst.msk [vmem:[%s16 + $0x8] sm:$0xff] %vm108, %v1248
  %1259 = vst.msk [vmem:[%s16 + $0x10] sm:$0xff] %vm108, %v1250
  %1260 = vst.msk [vmem:[%s16 + $0x18] sm:$0xff] %vm108, %v1252
  %v1261 = vpack.c.bf16 %v1238, %v1237
  %v1262 = vpack.c.bf16 %v1240, %v1239
  %1265 = vrot.lane.b32.xlu0 %v1261, 96
  %v1266 = vpop.permute.xlu0 %1265
  %1267 = vrot.lane.b32.xlu0 %v1262, 96
  %v1268 = vpop.permute.xlu0 %1267
  %1271 = vmatprep.subr.bf16.mxu0 0
  %1272 = vmatpush1.bf16.msra.mxu0 %v1266
  %1273 = vmatprep.subr.bf16.mxu0 0
  %1274 = vmatpush1.bf16.msra.mxu0 %v1268
  %1275 = vmatprep.subr.bf16.mxu0 0
  %1276 = vmatpush1.bf16.msra.mxu0 0
  %1277 = vmatprep.subr.bf16.mxu0 0
  %1278 = vmatpush1.bf16.msra.mxu0 0
  %1279 = vmatprep.subr.bf16.mxu0 0
  %1280 = vmatpush1.bf16.msra.mxu0 0
  %1281 = vmatprep.subr.bf16.mxu0 0
  %1282 = vmatpush1.bf16.msra.mxu0 0
  %1283 = vmatprep.subr.bf16.mxu0 0
  %1284 = vmatpush1.bf16.msra.mxu0 0
  %1285 = vmatprep.subr.bf16.mxu0 0
  %1286 = vmatpush1.bf16.msra.mxu0 0
  %1287 = vmatprep.subr.bf16.mxu0 0
  %1288 = vmatpush1.bf16.msra.mxu0 0
  %1289 = vmatprep.subr.bf16.mxu0 0
  %1290 = vmatpush1.bf16.msra.mxu0 0
  %1291 = vmatprep.subr.bf16.mxu0 0
  %1292 = vmatpush1.bf16.msra.mxu0 0
  %1293 = vmatprep.subr.bf16.mxu0 0
  %1294 = vmatpush1.bf16.msra.mxu0 0
  %1295 = vmatprep.subr.bf16.mxu0 0
  %1296 = vmatpush1.bf16.msra.mxu0 0
  %1297 = vmatprep.subr.bf16.mxu0 0
  %1298 = vmatpush1.bf16.msra.mxu0 0
  %1299 = vmatprep.subr.bf16.mxu0 0
  %1300 = vmatpush1.bf16.msra.mxu0 0
  %1301 = vmatprep.subr.bf16.mxu0 0
  %1302 = vmatpush1.bf16.msra.mxu0 0
  %1303 = vmatprep.mubr.bf16.mxu0 0
  %1304 = vmatmul.mubr.bf16.gmra.mrb[0].mxu0 %v110
  %v1305 = vpop.f32.mrb[0].mxu0
  %v1306 = vadd.f32 0.0, %v1305
  %v1307 = vpop.f32.mrb[0].mxu0
  %v1308 = vpop.f32.mrb[0].mxu0
  %v1309 = vadd.f32 0.0, %v1308
  %v1310 = vpop.f32.mrb[0].mxu0
  %1311 = vmatprep.mubr.bf16.mxu0 0
  %1312 = vmatmul.mubr.bf16.gmra.mrb[0].mxu0 %v113
  %v1313 = vpop.f32.mrb[0].mxu0
  %v1314 = vadd.f32 0.0, %v1313
  %v1315 = vpop.f32.mrb[0].mxu0
  %v1316 = vpop.f32.mrb[0].mxu0
  %v1317 = vadd.f32 0.0, %v1316
  %v1318 = vpop.f32.mrb[0].mxu0
  %1319 = vdwg.mxu0
  %v1320 = vpack.c.bf16 %v1309, %v1306
  %v1321 = vpack.c.bf16 %v1317, %v1314
  %1322 = vmatprep.subr.bf16.mxu0 0
  %1323 = vmatpush1.bf16.msra.mxu0 %v1320
  %1324 = vmatprep.subr.bf16.mxu0 0
  %1325 = vmatpush1.bf16.msra.mxu0 %v1321
  %1326 = vmatprep.subr.bf16.mxu0 0
  %1327 = vmatpush1.bf16.msra.mxu0 0
  %1328 = vmatprep.subr.bf16.mxu0 0
  %1329 = vmatpush1.bf16.msra.mxu0 0
  %1330 = vmatprep.subr.bf16.mxu0 0
  %1331 = vmatpush1.bf16.msra.mxu0 0
  %1332 = vmatprep.subr.bf16.mxu0 0
  %1333 = vmatpush1.bf16.msra.mxu0 0
  %1334 = vmatprep.subr.bf16.mxu0 0
  %1335 = vmatpush1.bf16.msra.mxu0 0
  %1336 = vmatprep.subr.bf16.mxu0 0
  %1337 = vmatpush1.bf16.msra.mxu0 0
  %1338 = vmatprep.subr.bf16.mxu0 0
  %1339 = vmatpush1.bf16.msra.mxu0 0
  %1340 = vmatprep.subr.bf16.mxu0 0
  %1341 = vmatpush1.bf16.msra.mxu0 0
  %1342 = vmatprep.subr.bf16.mxu0 0
  %1343 = vmatpush1.bf16.msra.mxu0 0
  %1344 = vmatprep.subr.bf16.mxu0 0
  %1345 = vmatpush1.bf16.msra.mxu0 0
  %1346 = vmatprep.subr.bf16.mxu0 0
  %1347 = vmatpush1.bf16.msra.mxu0 0
  %1348 = vmatprep.subr.bf16.mxu0 0
  %1349 = vmatpush1.bf16.msra.mxu0 0
  %1350 = vmatprep.subr.bf16.mxu0 0
  %1351 = vmatpush1.bf16.msra.mxu0 0
  %1352 = vmatprep.subr.bf16.mxu0 0
  %1353 = vmatpush1.bf16.msra.mxu0 0
  %1354 = vmatprep.mubr.bf16.mxu0 0
  %1355 = vmatmul.mubr.bf16.gmra.mrb[0].mxu0 %v110
  %v1356 = vpop.f32.mrb[0].mxu0
  %v1357 = vadd.f32 0.0, %v1356
  %v1358 = vpop.f32.mrb[0].mxu0
  %v1359 = vpop.f32.mrb[0].mxu0
  %v1360 = vadd.f32 0.0, %v1359
  %v1361 = vpop.f32.mrb[0].mxu0
  %1362 = vmatprep.mubr.bf16.mxu0 0
  %1363 = vmatmul.mubr.bf16.gmra.mrb[0].mxu0 %v113
  %v1364 = vpop.f32.mrb[0].mxu0
  %v1365 = vadd.f32 0.0, %v1364
  %v1366 = vpop.f32.mrb[0].mxu0
  %v1367 = vpop.f32.mrb[0].mxu0
  %v1368 = vadd.f32 0.0, %v1367
  %v1369 = vpop.f32.mrb[0].mxu0
  %1370 = vdwg.mxu0
  %v1371 = vmul.f32 %v1357, 2.0
  %v1372 = vmul.f32 %v1360, 2.0
  %v1373 = vmul.f32 %v1365, 2.0
  %v1374 = vmul.f32 %v1368, 2.0
  %v1375 = vsub.f32 %v1371, %v1246
  %v1376 = vsub.f32 %v1372, %v1248
  %v1377 = vsub.f32 %v1373, %v1250
  %v1378 = vsub.f32 %v1374, %v1252
  %1383 = vrot.lane.b32.xlu0 %v1306, 32
  %v1384 = vpop.permute.xlu0 %1383
  %1385 = vrot.lane.b32.xlu0 %v1309, 32
  %v1386 = vpop.permute.xlu0 %1385
  %1387 = vrot.lane.b32.xlu0 %v1314, 32
  %v1388 = vpop.permute.xlu0 %1387
  %1389 = vrot.lane.b32.xlu0 %v1317, 32
  %v1390 = vpop.permute.xlu0 %1389
  %1399 = vrot.lane.b32.xlu0 %v1375, 64
  %v1400 = vpop.permute.xlu0 %1399
  %1401 = vrot.lane.b32.xlu0 %v1376, 64
  %v1402 = vpop.permute.xlu0 %1401
  %1403 = vrot.lane.b32.xlu0 %v1377, 64
  %v1404 = vpop.permute.xlu0 %1403
  %1405 = vrot.lane.b32.xlu0 %v1378, 64
  %v1406 = vpop.permute.xlu0 %1405
  %v1411 = vsel %vm108, %v1246, %v1384
  %v1412 = vsel %vm108, %v1248, %v1386
  %v1413 = vsel %vm108, %v1250, %v1388
  %v1414 = vsel %vm108, %v1252, %v1390
  %v1415 = vsel %vm259, %v1411, %v1400
  %v1416 = vsel %vm259, %v1412, %v1402
  %v1417 = vsel %vm259, %v1413, %v1404
  %v1418 = vsel %vm259, %v1414, %v1406
  %v1419 = vpack.c.bf16 %v1416, %v1415
  %v1420 = vpack.c.bf16 %v1418, %v1417
  %v1421 = vld [vmem:[%s8] sm:$0xf]
  %v1422 = vld [vmem:[%s8 + $0x4] sm:$0xf]
  %v1423 = vld [vmem:[%s8 + $0x8] sm:$0xf]
  %v1424 = vld [vmem:[%s8 + $0xc] sm:$0xf]
  %v1425 = vld [vmem:[%s8 + $0x10] sm:$0xf]
  %v1426 = vld [vmem:[%s8 + $0x14] sm:$0xf]
  %v1427 = vld [vmem:[%s8 + $0x18] sm:$0xf]
  %v1428 = vld [vmem:[%s8 + $0x1c] sm:$0xf]
  %v1429 = vld [vmem:[%s8 + $0x20] sm:$0xf]
  %v1430 = vld [vmem:[%s8 + $0x24] sm:$0xf]
  %v1431 = vld [vmem:[%s8 + $0x28] sm:$0xf]
  %v1432 = vld [vmem:[%s8 + $0x2c] sm:$0xf]
  %v1445 = vunpack.c.l.b16 %v1421
  %v1446 = vunpack.c.l.b16 %v1422
  %v1447 = vunpack.c.l.b16 %v1423
  %v1448 = vunpack.c.l.b16 %v1424
  %v1449 = vunpack.c.l.b16 %v1425
  %v1450 = vunpack.c.l.b16 %v1426
  %v1451 = vunpack.c.l.b16 %v1427
  %v1452 = vunpack.c.l.b16 %v1428
  %v1453 = vunpack.c.l.b16 %v1429
  %v1454 = vunpack.c.l.b16 %v1430
  %v1455 = vunpack.c.l.b16 %v1431
  %v1456 = vunpack.c.l.b16 %v1432
  %v1457 = vpack.c.b16 %v1446, %v1445
  %v1458 = vpack.c.b16 %v1448, %v1447
  %v1459 = vpack.c.b16 %v1450, %v1449
  %v1460 = vpack.c.b16 %v1452, %v1451
  %v1461 = vpack.c.b16 %v1454, %v1453
  %v1462 = vpack.c.b16 %v1456, %v1455
  %v1470 = vsel %vm321, %v1419, 0
  %v1473 = vsel %vm321, %v1420, 0
  %1475 = vmatprep.subr.bf16.mxu0 0
  %1476 = vmatpush1.bf16.msra.mxu0 %v1457
  %1477 = vmatprep.subr.bf16.mxu0 0
  %1478 = vmatpush1.bf16.msra.mxu0 %v1458
  %1479 = vmatprep.subr.bf16.mxu0 0
  %1480 = vmatpush1.bf16.msra.mxu0 %v1459
  %1481 = vmatprep.subr.bf16.mxu0 0
  %1482 = vmatpush1.bf16.msra.mxu0 %v1460
  %1483 = vmatprep.subr.bf16.mxu0 0
  %1484 = vmatpush1.bf16.msra.mxu0 %v1461
  %1485 = vmatprep.subr.bf16.mxu0 0
  %1486 = vmatpush1.bf16.msra.mxu0 %v1462
  %1487 = vmatprep.subr.bf16.mxu0 0
  %1488 = vmatpush1.bf16.msra.mxu0 0
  %1489 = vmatprep.subr.bf16.mxu0 0
  %1490 = vmatpush1.bf16.msra.mxu0 0
  %1491 = vmatprep.subr.bf16.mxu0 0
  %1492 = vmatpush1.bf16.msra.mxu0 0
  %1493 = vmatprep.subr.bf16.mxu0 0
  %1494 = vmatpush1.bf16.msra.mxu0 0
  %1495 = vmatprep.subr.bf16.mxu0 0
  %1496 = vmatpush1.bf16.msra.mxu0 0
  %1497 = vmatprep.subr.bf16.mxu0 0
  %1498 = vmatpush1.bf16.msra.mxu0 0
  %1499 = vmatprep.subr.bf16.mxu0 0
  %1500 = vmatpush1.bf16.msra.mxu0 0
  %1501 = vmatprep.subr.bf16.mxu0 0
  %1502 = vmatpush1.bf16.msra.mxu0 0
  %1503 = vmatprep.subr.bf16.mxu0 0
  %1504 = vmatpush1.bf16.msra.mxu0 0
  %1505 = vmatprep.subr.bf16.mxu0 0
  %1506 = vmatpush1.bf16.msra.mxu0 0
  %1507 = vmatprep.mubr.bf16.mxu0 0
  %1508 = vmatmul.mubr.bf16.gmra.mrb[0].mxu0 %v1470
  %v1509 = vpop.f32.mrb[0].mxu0
  %v1510 = vadd.f32 0.0, %v1509
  %v1511 = vpop.f32.mrb[0].mxu0
  %v1512 = vpop.f32.mrb[0].mxu0
  %v1513 = vadd.f32 0.0, %v1512
  %v1514 = vpop.f32.mrb[0].mxu0
  %1515 = vmatprep.mubr.bf16.mxu0 0
  %1516 = vmatmul.mubr.bf16.gmra.mrb[0].mxu0 %v1473
  %v1517 = vpop.f32.mrb[0].mxu0
  %v1518 = vadd.f32 0.0, %v1517
  %v1519 = vpop.f32.mrb[0].mxu0
  %v1520 = vpop.f32.mrb[0].mxu0
  %v1521 = vadd.f32 0.0, %v1520
  %v1522 = vpop.f32.mrb[0].mxu0
  %1523 = vdwg.mxu0
  %v1524 = vadd.f32 %v1510, %v625
  %v1525 = vadd.f32 %v1513, %v628
  %v1526 = vadd.f32 %v1518, %v633
  %v1527 = vadd.f32 %v1521, %v636
  %v1528 = vxor.u32 %v1524, 2147483648
  %v1529 = vxor.u32 %v1525, 2147483648
  %v1530 = vxor.u32 %v1526, 2147483648
  %v1531 = vxor.u32 %v1527, 2147483648
  %v1532 = vmul.f32 %v1528, 1.442695
  %v1533 = vpow.pop %v1532
  %v1534 = vmul.f32 %v1529, 1.442695
  %v1535 = vpow.pop %v1534
  %v1536 = vmul.f32 %v1530, 1.442695
  %v1537 = vpow.pop %v1536
  %v1538 = vmul.f32 %v1531, 1.442695
  %v1539 = vpow.pop %v1538
  %v1540 = vadd.f32 %v1533, 1.0
  %v1541 = vadd.f32 %v1535, 1.0
  %v1542 = vadd.f32 %v1537, 1.0
  %v1543 = vadd.f32 %v1539, 1.0
  %v1544 = vrcp.pop %v1540
  %v1545 = vmul.f32 1.0, %v1544
  %v1546 = vrcp.pop %v1541
  %v1547 = vmul.f32 1.0, %v1546
  %v1548 = vrcp.pop %v1542
  %v1549 = vmul.f32 1.0, %v1548
  %v1550 = vrcp.pop %v1543
  %v1551 = vmul.f32 1.0, %v1550
  %v1552 = vmul.f32 %v1545, %v92
  %v1553 = vmul.f32 %v1547, %v93
  %v1554 = vmul.f32 %v1549, %v94
  %v1555 = vmul.f32 %v1551, %v95
  %v1556 = vpack.c.bf16 %v1553, %v1552
  %v1557 = vpack.c.bf16 %v1555, %v1554
  %1558 = vmatprep.subr.bf16.mxu0 0
  %1559 = vmatpush1.bf16.msra.mxu0 %v1556
  %1560 = vmatprep.subr.bf16.mxu0 0
  %1561 = vmatpush1.bf16.msra.mxu0 %v1557
  %1562 = vmatprep.subr.bf16.mxu0 0
  %1563 = vmatpush1.bf16.msra.mxu0 0
  %1564 = vmatprep.subr.bf16.mxu0 0
  %1565 = vmatpush1.bf16.msra.mxu0 0
  %1566 = vmatprep.subr.bf16.mxu0 0
  %1567 = vmatpush1.bf16.msra.mxu0 0
  %1568 = vmatprep.subr.bf16.mxu0 0
  %1569 = vmatpush1.bf16.msra.mxu0 0
  %1570 = vmatprep.subr.bf16.mxu0 0
  %1571 = vmatpush1.bf16.msra.mxu0 0
  %1572 = vmatprep.subr.bf16.mxu0 0
  %1573 = vmatpush1.bf16.msra.mxu0 0
  %1574 = vmatprep.subr.bf16.mxu0 0
  %1575 = vmatpush1.bf16.msra.mxu0 0
  %1576 = vmatprep.subr.bf16.mxu0 0
  %1577 = vmatpush1.bf16.msra.mxu0 0
  %1578 = vmatprep.subr.bf16.mxu0 0
  %1579 = vmatpush1.bf16.msra.mxu0 0
  %1580 = vmatprep.subr.bf16.mxu0 0
  %1581 = vmatpush1.bf16.msra.mxu0 0
  %1582 = vmatprep.subr.bf16.mxu0 0
  %1583 = vmatpush1.bf16.msra.mxu0 0
  %1584 = vmatprep.subr.bf16.mxu0 0
  %1585 = vmatpush1.bf16.msra.mxu0 0
  %1586 = vmatprep.subr.bf16.mxu0 0
  %1587 = vmatpush1.bf16.msra.mxu0 0
  %1588 = vmatprep.subr.bf16.mxu0 0
  %1589 = vmatpush1.bf16.msra.mxu0 0
  %1590 = vmatprep.mubr.bf16.mxu0 0
  %1591 = vmatmul.mubr.bf16.gmra.mrb[0].mxu0 %v110
  %v1592 = vpop.f32.mrb[0].mxu0
  %v1593 = vadd.f32 0.0, %v1592
  %v1594 = vpop.f32.mrb[0].mxu0
  %v1595 = vpop.f32.mrb[0].mxu0
  %v1596 = vadd.f32 0.0, %v1595
  %v1597 = vpop.f32.mrb[0].mxu0
  %1598 = vmatprep.mubr.bf16.mxu0 0
  %1599 = vmatmul.mubr.bf16.gmra.mrb[0].mxu0 %v113
  %v1600 = vpop.f32.mrb[0].mxu0
  %v1601 = vadd.f32 0.0, %v1600
  %v1602 = vpop.f32.mrb[0].mxu0
  %v1603 = vpop.f32.mrb[0].mxu0
  %v1604 = vadd.f32 0.0, %v1603
  %v1605 = vpop.f32.mrb[0].mxu0
  %1606 = vdwg.mxu0
  %v1607 = vpack.c.bf16 %v1596, %v1593
  %v1608 = vpack.c.bf16 %v1604, %v1601
  %1609 = vmatprep.subr.bf16.mxu0 0
  %1610 = vmatpush1.bf16.msra.mxu0 %v1607
  %1611 = vmatprep.subr.bf16.mxu0 0
  %1612 = vmatpush1.bf16.msra.mxu0 %v1608
  %1613 = vmatprep.subr.bf16.mxu0 0
  %1614 = vmatpush1.bf16.msra.mxu0 0
  %1615 = vmatprep.subr.bf16.mxu0 0
  %1616 = vmatpush1.bf16.msra.mxu0 0
  %1617 = vmatprep.subr.bf16.mxu0 0
  %1618 = vmatpush1.bf16.msra.mxu0 0
  %1619 = vmatprep.subr.bf16.mxu0 0
  %1620 = vmatpush1.bf16.msra.mxu0 0
  %1621 = vmatprep.subr.bf16.mxu0 0
  %1622 = vmatpush1.bf16.msra.mxu0 0
  %1623 = vmatprep.subr.bf16.mxu0 0
  %1624 = vmatpush1.bf16.msra.mxu0 0
  %1625 = vmatprep.subr.bf16.mxu0 0
  %1626 = vmatpush1.bf16.msra.mxu0 0
  %1627 = vmatprep.subr.bf16.mxu0 0
  %1628 = vmatpush1.bf16.msra.mxu0 0
  %1629 = vmatprep.subr.bf16.mxu0 0
  %1630 = vmatpush1.bf16.msra.mxu0 0
  %1631 = vmatprep.subr.bf16.mxu0 0
  %1632 = vmatpush1.bf16.msra.mxu0 0
  %1633 = vmatprep.subr.bf16.mxu0 0
  %1634 = vmatpush1.bf16.msra.mxu0 0
  %1635 = vmatprep.subr.bf16.mxu0 0
  %1636 = vmatpush1.bf16.msra.mxu0 0
  %1637 = vmatprep.subr.bf16.mxu0 0
  %1638 = vmatpush1.bf16.msra.mxu0 0
  %1639 = vmatprep.subr.bf16.mxu0 0
  %1640 = vmatpush1.bf16.msra.mxu0 0
  %1641 = vmatprep.mubr.bf16.mxu0 0
  %1642 = vmatmul.mubr.bf16.gmra.mrb[0].mxu0 %v110
  %v1643 = vpop.f32.mrb[0].mxu0
  %v1644 = vadd.f32 0.0, %v1643
  %v1645 = vpop.f32.mrb[0].mxu0
  %v1646 = vpop.f32.mrb[0].mxu0
  %v1647 = vadd.f32 0.0, %v1646
  %v1648 = vpop.f32.mrb[0].mxu0
  %1649 = vmatprep.mubr.bf16.mxu0 0
  %1650 = vmatmul.mubr.bf16.gmra.mrb[0].mxu0 %v113
  %v1651 = vpop.f32.mrb[0].mxu0
  %v1652 = vadd.f32 0.0, %v1651
  %v1653 = vpop.f32.mrb[0].mxu0
  %v1654 = vpop.f32.mrb[0].mxu0
  %v1655 = vadd.f32 0.0, %v1654
  %v1656 = vpop.f32.mrb[0].mxu0
  %1657 = vdwg.mxu0
  %v1658 = vmul.f32 %v1644, 2.0
  %v1659 = vmul.f32 %v1647, 2.0
  %v1660 = vmul.f32 %v1652, 2.0
  %v1661 = vmul.f32 %v1655, 2.0
  %v1662 = vsub.f32 %v1658, %v1552
  %v1663 = vsub.f32 %v1659, %v1553
  %v1664 = vsub.f32 %v1660, %v1554
  %v1665 = vsub.f32 %v1661, %v1555
  %1670 = vrot.lane.b32.xlu0 %v1593, 32
  %v1671 = vpop.permute.xlu0 %1670
  %1672 = vrot.lane.b32.xlu0 %v1596, 32
  %v1673 = vpop.permute.xlu0 %1672
  %1674 = vrot.lane.b32.xlu0 %v1601, 32
  %v1675 = vpop.permute.xlu0 %1674
  %1676 = vrot.lane.b32.xlu0 %v1604, 32
  %v1677 = vpop.permute.xlu0 %1676
  %1686 = vrot.lane.b32.xlu0 %v1662, 64
  %v1687 = vpop.permute.xlu0 %1686
  %1688 = vrot.lane.b32.xlu0 %v1663, 64
  %v1689 = vpop.permute.xlu0 %1688
  %1690 = vrot.lane.b32.xlu0 %v1664, 64
  %v1691 = vpop.permute.xlu0 %1690
  %1692 = vrot.lane.b32.xlu0 %v1665, 64
  %v1693 = vpop.permute.xlu0 %1692
  %v1698 = vsel %vm108, %v1552, %v1671
  %v1699 = vsel %vm108, %v1553, %v1673
  %v1700 = vsel %vm108, %v1554, %v1675
  %v1701 = vsel %vm108, %v1555, %v1677
  %v1702 = vsel %vm259, %v1698, %v1687
  %v1703 = vsel %vm259, %v1699, %v1689
  %v1704 = vsel %vm259, %v1700, %v1691
  %v1705 = vsel %vm259, %v1701, %v1693
  %v1706 = vpack.c.bf16 %v1703, %v1702
  %v1707 = vpack.c.bf16 %v1705, %v1704
  %v1708 = vld [vmem:[%s10] sm:$0xf]
  %v1709 = vld [vmem:[%s10 + $0x4] sm:$0xf]
  %v1710 = vld [vmem:[%s10 + $0x8] sm:$0xf]
  %v1711 = vld [vmem:[%s10 + $0xc] sm:$0xf]
  %v1712 = vld [vmem:[%s10 + $0x10] sm:$0xf]
  %v1713 = vld [vmem:[%s10 + $0x14] sm:$0xf]
  %v1714 = vld [vmem:[%s10 + $0x18] sm:$0xf]
  %v1715 = vld [vmem:[%s10 + $0x1c] sm:$0xf]
  %v1716 = vld [vmem:[%s10 + $0x20] sm:$0xf]
  %v1717 = vld [vmem:[%s10 + $0x24] sm:$0xf]
  %v1718 = vld [vmem:[%s10 + $0x28] sm:$0xf]
  %v1719 = vld [vmem:[%s10 + $0x2c] sm:$0xf]
  %v1732 = vunpack.c.l.b16 %v1708
  %v1733 = vunpack.c.l.b16 %v1709
  %v1734 = vunpack.c.l.b16 %v1710
  %v1735 = vunpack.c.l.b16 %v1711
  %v1736 = vunpack.c.l.b16 %v1712
  %v1737 = vunpack.c.l.b16 %v1713
  %v1738 = vunpack.c.l.b16 %v1714
  %v1739 = vunpack.c.l.b16 %v1715
  %v1740 = vunpack.c.l.b16 %v1716
  %v1741 = vunpack.c.l.b16 %v1717
  %v1742 = vunpack.c.l.b16 %v1718
  %v1743 = vunpack.c.l.b16 %v1719
  %v1744 = vpack.c.b16 %v1733, %v1732
  %v1745 = vpack.c.b16 %v1735, %v1734
  %v1746 = vpack.c.b16 %v1737, %v1736
  %v1747 = vpack.c.b16 %v1739, %v1738
  %v1748 = vpack.c.b16 %v1741, %v1740
  %v1749 = vpack.c.b16 %v1743, %v1742
  %v1757 = vsel %vm321, %v1706, 0
  %v1760 = vsel %vm321, %v1707, 0
  %1762 = vmatprep.subr.bf16.mxu0 0
  %1763 = vmatpush1.bf16.msra.mxu0 %v1744
  %1764 = vmatprep.subr.bf16.mxu0 0
  %1765 = vmatpush1.bf16.msra.mxu0 %v1745
  %1766 = vmatprep.subr.bf16.mxu0 0
  %1767 = vmatpush1.bf16.msra.mxu0 %v1746
  %1768 = vmatprep.subr.bf16.mxu0 0
  %1769 = vmatpush1.bf16.msra.mxu0 %v1747
  %1770 = vmatprep.subr.bf16.mxu0 0
  %1771 = vmatpush1.bf16.msra.mxu0 %v1748
  %1772 = vmatprep.subr.bf16.mxu0 0
  %1773 = vmatpush1.bf16.msra.mxu0 %v1749
  %1774 = vmatprep.subr.bf16.mxu0 0
  %1775 = vmatpush1.bf16.msra.mxu0 0
  %1776 = vmatprep.subr.bf16.mxu0 0
  %1777 = vmatpush1.bf16.msra.mxu0 0
  %1778 = vmatprep.subr.bf16.mxu0 0
  %1779 = vmatpush1.bf16.msra.mxu0 0
  %1780 = vmatprep.subr.bf16.mxu0 0
  %1781 = vmatpush1.bf16.msra.mxu0 0
  %1782 = vmatprep.subr.bf16.mxu0 0
  %1783 = vmatpush1.bf16.msra.mxu0 0
  %1784 = vmatprep.subr.bf16.mxu0 0
  %1785 = vmatpush1.bf16.msra.mxu0 0
  %1786 = vmatprep.subr.bf16.mxu0 0
  %1787 = vmatpush1.bf16.msra.mxu0 0
  %1788 = vmatprep.subr.bf16.mxu0 0
  %1789 = vmatpush1.bf16.msra.mxu0 0
  %1790 = vmatprep.subr.bf16.mxu0 0
  %1791 = vmatpush1.bf16.msra.mxu0 0
  %1792 = vmatprep.subr.bf16.mxu0 0
  %1793 = vmatpush1.bf16.msra.mxu0 0
  %1794 = vmatprep.mubr.bf16.mxu0 0
  %1795 = vmatmul.mubr.bf16.gmra.mrb[0].mxu0 %v1757
  %v1796 = vpop.f32.mrb[0].mxu0
  %v1797 = vadd.f32 0.0, %v1796
  %v1798 = vpop.f32.mrb[0].mxu0
  %v1799 = vpop.f32.mrb[0].mxu0
  %v1800 = vadd.f32 0.0, %v1799
  %v1801 = vpop.f32.mrb[0].mxu0
  %1802 = vmatprep.mubr.bf16.mxu0 0
  %1803 = vmatmul.mubr.bf16.gmra.mrb[0].mxu0 %v1760
  %v1804 = vpop.f32.mrb[0].mxu0
  %v1805 = vadd.f32 0.0, %v1804
  %v1806 = vpop.f32.mrb[0].mxu0
  %v1807 = vpop.f32.mrb[0].mxu0
  %v1808 = vadd.f32 0.0, %v1807
  %v1809 = vpop.f32.mrb[0].mxu0
  %1810 = vdwg.mxu0
  %1815 = vrot.lane.b32.xlu0 %v1797, 64
  %v1816 = vpop.permute.xlu0 %1815
  %1817 = vrot.lane.b32.xlu0 %v1800, 64
  %v1818 = vpop.permute.xlu0 %1817
  %1819 = vrot.lane.b32.xlu0 %v1805, 64
  %v1820 = vpop.permute.xlu0 %1819
  %1821 = vrot.lane.b32.xlu0 %v1808, 64
  %v1822 = vpop.permute.xlu0 %1821
  %v1827 = vadd.f32 %v1510, %v1816
  %v1828 = vadd.f32 %v1513, %v1818
  %v1829 = vadd.f32 %v1518, %v1820
  %v1830 = vadd.f32 %v1521, %v1822
  %v1831 = vld [vmem:[%s12] sm:$0x1]
  %v1833 = vlaneseq
  %v1834 = vshrl.u32 %v1833, 7
  %v1835 = vsub.s32 0, %v1834
  %v1836 = vrot.slane %v1831, %v1835
  %1837 = vrot.lane.b32.xlu0 %v1836, 64
  %v1838 = vpop.permute.xlu0 %1837
  %v1840 = vadd.f32 %v1827, %v1838
  %v1841 = vadd.f32 %v1828, %v1838
  %v1842 = vadd.f32 %v1829, %v1838
  %v1843 = vadd.f32 %v1830, %v1838
  %v1844 = vtanh.pop %v1840
  %v1845 = vtanh.pop %v1841
  %v1846 = vtanh.pop %v1842
  %v1847 = vtanh.pop %v1843
  %1852 = vrot.lane.b32.xlu0 %v92, 32
  %v1853 = vpop.permute.xlu0 %1852
  %1854 = vrot.lane.b32.xlu0 %v93, 32
  %v1855 = vpop.permute.xlu0 %1854
  %1856 = vrot.lane.b32.xlu0 %v94, 32
  %v1857 = vpop.permute.xlu0 %1856
  %1858 = vrot.lane.b32.xlu0 %v95, 32
  %v1859 = vpop.permute.xlu0 %1858
  %v1864 = vmul.f32 %v1545, %v1853
  %v1865 = vmul.f32 %v1547, %v1855
  %v1866 = vmul.f32 %v1549, %v1857
  %v1867 = vmul.f32 %v1551, %v1859
  %v1868 = vsub.f32 1.0, %v1545
  %v1869 = vsub.f32 1.0, %v1547
  %v1870 = vsub.f32 1.0, %v1549
  %v1871 = vsub.f32 1.0, %v1551
  %1876 = vrot.lane.b32.xlu0 %v1844, 96
  %v1877 = vpop.permute.xlu0 %1876
  %1878 = vrot.lane.b32.xlu0 %v1845, 96
  %v1879 = vpop.permute.xlu0 %1878
  %1880 = vrot.lane.b32.xlu0 %v1846, 96
  %v1881 = vpop.permute.xlu0 %1880
  %1882 = vrot.lane.b32.xlu0 %v1847, 96
  %v1883 = vpop.permute.xlu0 %1882
  %v1888 = vmul.f32 %v1868, %v1877
  %v1889 = vmul.f32 %v1869, %v1879
  %v1890 = vmul.f32 %v1870, %v1881
  %v1891 = vmul.f32 %v1871, %v1883
  %v1892 = vadd.f32 %v1864, %v1888
  %v1893 = vadd.f32 %v1865, %v1889
  %v1894 = vadd.f32 %v1866, %v1890
  %v1895 = vadd.f32 %v1867, %v1891
  %1900 = vrot.lane.b32.xlu0 %v1892, 96
  %v1901 = vpop.permute.xlu0 %1900
  %1902 = vrot.lane.b32.xlu0 %v1893, 96
  %v1903 = vpop.permute.xlu0 %1902
  %1904 = vrot.lane.b32.xlu0 %v1894, 96
  %v1905 = vpop.permute.xlu0 %1904
  %1906 = vrot.lane.b32.xlu0 %v1895, 96
  %v1907 = vpop.permute.xlu0 %1906
  %1912 = vst.msk [vmem:[%s91] sm:$0xff] %vm108, %v1901
  %1913 = vst.msk [vmem:[%s91 + $0x8] sm:$0xff] %vm108, %v1903
  %1914 = vst.msk [vmem:[%s91 + $0x10] sm:$0xff] %vm108, %v1905
  %1915 = vst.msk [vmem:[%s91 + $0x18] sm:$0xff] %vm108, %v1907
  %v1916 = vpack.c.bf16 %v1893, %v1892
  %v1917 = vpack.c.bf16 %v1895, %v1894
  %v1918 = vld [vmem:[%s13] sm:$0xf]
  %v1919 = vld [vmem:[%s13 + $0x4] sm:$0xf]
  %v1920 = vld [vmem:[%s13 + $0x8] sm:$0xf]
  %v1921 = vld [vmem:[%s13 + $0xc] sm:$0xf]
  %v1922 = vld [vmem:[%s14] sm:$0x1]
  %v1924 = vlaneseq
  %v1925 = vshrl.u32 %v1924, 7
  %v1926 = vsub.s32 0, %v1925
  %v1927 = vrot.slane %v1922, %v1926
  %1931 = vrot.lane.b32.xlu0 %v1916, 96
  %v1932 = vpop.permute.xlu0 %1931
  %1933 = vrot.lane.b32.xlu0 %v1917, 96
  %v1934 = vpop.permute.xlu0 %1933
  %v1939 = vunpack.c.l.b16 %v1918
  %v1940 = vunpack.c.l.b16 %v1919
  %v1941 = vunpack.c.l.b16 %v1920
  %v1942 = vunpack.c.l.b16 %v1921
  %v1943 = vpack.c.b16 %v1940, %v1939
  %v1944 = vpack.c.b16 %v1942, %v1941
  %v1948 = vsel %vm108, %v1932, 0
  %v1951 = vsel %vm108, %v1934, 0
  %1953 = vmatprep.subr.bf16.mxu0 0
  %1954 = vmatpush1.bf16.msra.mxu0 %v1943
  %1955 = vmatprep.subr.bf16.mxu0 0
  %1956 = vmatpush1.bf16.msra.mxu0 %v1944
  %1957 = vmatprep.subr.bf16.mxu0 0
  %1958 = vmatpush1.bf16.msra.mxu0 0
  %1959 = vmatprep.subr.bf16.mxu0 0
  %1960 = vmatpush1.bf16.msra.mxu0 0
  %1961 = vmatprep.subr.bf16.mxu0 0
  %1962 = vmatpush1.bf16.msra.mxu0 0
  %1963 = vmatprep.subr.bf16.mxu0 0
  %1964 = vmatpush1.bf16.msra.mxu0 0
  %1965 = vmatprep.subr.bf16.mxu0 0
  %1966 = vmatpush1.bf16.msra.mxu0 0
  %1967 = vmatprep.subr.bf16.mxu0 0
  %1968 = vmatpush1.bf16.msra.mxu0 0
  %1969 = vmatprep.subr.bf16.mxu0 0
  %1970 = vmatpush1.bf16.msra.mxu0 0
  %1971 = vmatprep.subr.bf16.mxu0 0
  %1972 = vmatpush1.bf16.msra.mxu0 0
  %1973 = vmatprep.subr.bf16.mxu0 0
  %1974 = vmatpush1.bf16.msra.mxu0 0
  %1975 = vmatprep.subr.bf16.mxu0 0
  %1976 = vmatpush1.bf16.msra.mxu0 0
  %1977 = vmatprep.subr.bf16.mxu0 0
  %1978 = vmatpush1.bf16.msra.mxu0 0
  %1979 = vmatprep.subr.bf16.mxu0 0
  %1980 = vmatpush1.bf16.msra.mxu0 0
  %1981 = vmatprep.subr.bf16.mxu0 0
  %1982 = vmatpush1.bf16.msra.mxu0 0
  %1983 = vmatprep.subr.bf16.mxu0 0
  %1984 = vmatpush1.bf16.msra.mxu0 0
  %1985 = vmatprep.mubr.bf16.mxu0 0
  %1986 = vmatmul.mubr.bf16.gmra.mrb[0].mxu0 %v1948
  %v1987 = vpop.f32.mrb[0].mxu0
  %v1988 = vadd.f32 %v1927, %v1987
  %v1989 = vpop.f32.mrb[0].mxu0
  %v1990 = vpop.f32.mrb[0].mxu0
  %v1991 = vadd.f32 %v1927, %v1990
  %v1992 = vpop.f32.mrb[0].mxu0
  %1993 = vmatprep.mubr.bf16.mxu0 0
  %1994 = vmatmul.mubr.bf16.gmra.mrb[0].mxu0 %v1951
  %v1995 = vpop.f32.mrb[0].mxu0
  %v1996 = vadd.f32 %v1927, %v1995
  %v1997 = vpop.f32.mrb[0].mxu0
  %v1998 = vpop.f32.mrb[0].mxu0
  %v1999 = vadd.f32 %v1927, %v1998
  %v2000 = vpop.f32.mrb[0].mxu0
  %2001 = vdwg.mxu0
  %2002 = vst.msk [vmem:[%s15] sm:$0xff] %vm785, %v1988
  %2003 = vst.msk [vmem:[%s15 + $0x8] sm:$0xff] %vm785, %v1991
  %2004 = vst.msk [vmem:[%s15 + $0x10] sm:$0xff] %vm785, %v1996
  %2005 = vst.msk [vmem:[%s15 + $0x18] sm:$0xff] %vm785, %v1999
  %2006 = vst.msk [vmem:[#allocation2] sm:$0xff] %vm785, %v1988
  %2007 = vst.msk [vmem:[#allocation2 + $0x8] sm:$0xff] %vm785, %v1991
  %2008 = vst.msk [vmem:[#allocation2 + $0x10] sm:$0xff] %vm785, %v1996
  %2009 = vst.msk [vmem:[#allocation2 + $0x18] sm:$0xff] %vm785, %v1999
  // Predicated region
  $region66: #{_decoder_run.1} parent=0 // pred_check
    _
  $region67: #{_decoder_run.1} parent=0 // pred_check_branch
    %2011 = sbr.rel (0) target = $region69
  $region68: #{_decoder_run.1} parent=0 // pred_region
    _
  $region69: #{_decoder_run.1} parent=0 // pred_fallthru
    _
  // Predicated region
  $region70: #{_decoder_run.1} parent=0 // pred_check
    _
  $region71: #{_decoder_run.1} parent=0 // pred_check_branch
    %2013 = sbr.rel (0) target = $region73
  $region72: #{_decoder_run.1} parent=0 // pred_region
    _
  $region73: #{_decoder_run.1} parent=0 // pred_fallthru
    _
  // Predicated region
  $region74: #{_decoder_run.1} parent=0 // pred_check
    _
  $region75: #{_decoder_run.1} parent=0 // pred_check_branch
    %2015 = sbr.rel (0) target = $region77
  $region76: #{_decoder_run.1} parent=0 // pred_region
    _
  $region77: #{_decoder_run.1} parent=0 // pred_fallthru
    _
  // Predicated region
  $region78: #{_decoder_run.1} parent=0 // pred_check
    _
  $region79: #{_decoder_run.1} parent=0 // pred_check_branch
    %2017 = sbr.rel (0) target = $region81
  $region80: #{_decoder_run.1} parent=0 // pred_region
    _
  $region81: #{_decoder_run.1} parent=0 // pred_fallthru
    _

</llo_original>
